<compile_context>
chip_gen: v6e
topology: v6e:2x2x1
jax: 0.10.0
libtpu: 0.0.40
codegen_flags: <defaults>
</compile_context>

<pallas_src>
import math

import jax
import jax.numpy as jnp
from jax.experimental import pallas as pl
from jax.experimental.pallas import tpu as pltpu


# ----------------------------------------------------------------------------
# Kernels
# ----------------------------------------------------------------------------
def _lstm_step_kernel(x_ref, wih_ref, whh_ref, b_ref, out_ref, h_scr, c_scr):
    """One LSTM timestep. Grid axis 0 iterates over the sequence.

    x_ref:   (1, B, D_in)   current timestep input
    wih_ref: (D_in, 4H)     input->gates weights (already transposed)
    whh_ref: (H, 4H)        hidden->gates weights (already transposed)
    b_ref:   (1, 4H)        combined bias (b_ih + b_hh)
    out_ref: (1, B, H)      hidden state output for this timestep
    h_scr, c_scr: (B, H) f32 persistent recurrent state.
    """
    @pl.when(pl.program_id(0) == 0)
    def _():
        h_scr[...] = jnp.zeros_like(h_scr)
        c_scr[...] = jnp.zeros_like(c_scr)

    x_t = x_ref[0].astype(jnp.float32)                      # (B, D_in)
    gates = (
        jnp.dot(x_t, wih_ref[...], preferred_element_type=jnp.float32)
        + jnp.dot(h_scr[...], whh_ref[...], preferred_element_type=jnp.float32)
        + b_ref[...]
    )                                                       # (B, 4H)

    H = h_scr.shape[1]
    i_g = jax.nn.sigmoid(gates[:, 0 * H:1 * H])
    f_g = jax.nn.sigmoid(gates[:, 1 * H:2 * H])
    g_g = jnp.tanh(gates[:, 2 * H:3 * H])
    o_g = jax.nn.sigmoid(gates[:, 3 * H:4 * H])

    c_new = f_g * c_scr[...] + i_g * g_g
    h_new = o_g * jnp.tanh(c_new)

    c_scr[...] = c_new
    h_scr[...] = h_new
    out_ref[0] = h_new.astype(out_ref.dtype)


def _fc_kernel(x_ref, w_ref, b_ref, o_ref):
    o_ref[...] = (
        jnp.dot(x_ref[...], w_ref[...], preferred_element_type=jnp.float32)
        + b_ref[...]
    ).astype(o_ref.dtype)


# ----------------------------------------------------------------------------
# Wrappers
# ----------------------------------------------------------------------------
def lstm_direction(x_tm, wih_t, whh_t, bias2d, *, reverse):
    """Run one direction of one LSTM layer over the full sequence.

    x_tm:    (S, B, D_in) time-major input
    wih_t:   (D_in, 4H)
    whh_t:   (H, 4H)
    bias2d:  (1, 4H)
    Returns: (S, B, H) time-major hidden states (in original time order).
    """
    S, B, D = x_tm.shape
    H = whh_t.shape[0]
    G = 4 * H

    def time_block(t):
        return (S - 1 - t) if reverse else t

    x_map = lambda t: (time_block(t), 0, 0)
    out_map = lambda t: (time_block(t), 0, 0)
    const_map2 = lambda t: (0, 0)

    return pl.pallas_call(
        _lstm_step_kernel,
        out_shape=jax.ShapeDtypeStruct((S, B, H), x_tm.dtype),
        grid_spec=pltpu.PrefetchScalarGridSpec(
            num_scalar_prefetch=0,
            grid=(S,),
            in_specs=[
                pl.BlockSpec((1, B, D), x_map),          # one timestep per step
                pl.BlockSpec((D, G), const_map2),        # VMEM-resident weights
                pl.BlockSpec((H, G), const_map2),
                pl.BlockSpec((1, G), const_map2),
            ],
            out_specs=pl.BlockSpec((1, B, H), out_map),
            scratch_shapes=[
                pltpu.VMEM((B, H), jnp.float32),         # h
                pltpu.VMEM((B, H), jnp.float32),         # c
            ],
        ),
        compiler_params=pltpu.CompilerParams(
            dimension_semantics=("arbitrary",),          # recurrent over time
        ),
    )(x_tm, wih_t, whh_t, bias2d)


def fc_forward(x, w_t, b):
    """x: (B, F); w_t: (F, O); b: (O,) -> (B, O)."""
    B, F = x.shape
    O = w_t.shape[1]
    b2 = b.reshape(1, O)
    return pl.pallas_call(
        _fc_kernel,
        out_shape=jax.ShapeDtypeStruct((B, O), x.dtype),
        grid=(1,),
        in_specs=[
            pl.BlockSpec((B, F), lambda i: (0, 0)),
            pl.BlockSpec((F, O), lambda i: (0, 0)),
            pl.BlockSpec((1, O), lambda i: (0, 0)),
        ],
        out_specs=pl.BlockSpec((B, O), lambda i: (0, 0)),
    )(x, w_t, b2)


def rnn_model_forward(x, lstm_params, fc_w_t, fc_b):
    """Matches RNNModel.forward: out, _ = lstm(x); out = fc(out[:, -1, :])."""
    x_tm = jnp.transpose(x, (1, 0, 2))                   # (S, B, D) time-major
    h_tm = x_tm
    for layer in lstm_params:
        fwd = lstm_direction(h_tm, *layer["fwd"], reverse=False)
        bwd = lstm_direction(h_tm, *layer["bwd"], reverse=True)
        h_tm = jnp.concatenate([fwd, bwd], axis=-1)      # (S, B, 2H)
    last = h_tm[-1]                                      # (B, 2H) == out[:, -1, :]
    return fc_forward(last, fc_w_t, fc_b)


# ----------------------------------------------------------------------------
# Parameter construction (PyTorch-style uniform(-1/sqrt(H), 1/sqrt(H)))
# ----------------------------------------------------------------------------
def init_params(key, input_size, hidden_size, num_layers, output_size):
    k = 1.0 / math.sqrt(hidden_size)
    layers = []
    in_sz = input_size
    for _ in range(num_layers):
        layer = {}
        for direction in ("fwd", "bwd"):
            key, k1, k2, k3, k4 = jax.random.split(key, 5)
            w_ih = jax.random.uniform(k1, (4 * hidden_size, in_sz), jnp.float32, -k, k)
            w_hh = jax.random.uniform(k2, (4 * hidden_size, hidden_size), jnp.float32, -k, k)
            b_ih = jax.random.uniform(k3, (4 * hidden_size,), jnp.float32, -k, k)
            b_hh = jax.random.uniform(k4, (4 * hidden_size,), jnp.float32, -k, k)
            layer[direction] = (w_ih.T, w_hh.T, (b_ih + b_hh)[None, :])
        layers.append(layer)
        in_sz = 2 * hidden_size
    key, k1, k2 = jax.random.split(key, 3)
    kf = 1.0 / math.sqrt(2 * hidden_size)
    fc_w = jax.random.uniform(k1, (output_size, 2 * hidden_size), jnp.float32, -kf, kf)
    fc_b = jax.random.uniform(k2, (output_size,), jnp.float32, -kf, kf)
    return layers, fc_w.T, fc_b


# ----------------------------------------------------------------------------
# Pure-JAX reference (same math as torch.nn.LSTM bidirectional + Linear)
# ----------------------------------------------------------------------------
def rnn_model_ref(x, lstm_params, fc_w_t, fc_b):
    B, S, _ = x.shape
    h_seq = x
    for layer in lstm_params:
        outs = []
        for name, reverse in (("fwd", False), ("bwd", True)):
            wih_t, whh_t, b = layer[name]
            H = whh_t.shape[0]
            h = jnp.zeros((B, H), jnp.float32)
            c = jnp.zeros((B, H), jnp.float32)
            ys = [None] * S
            trange = range(S - 1, -1, -1) if reverse else range(S)
            for t in trange:
                gates = h_seq[:, t, :] @ wih_t + h @ whh_t + b
                i_g, f_g, g_g, o_g = jnp.split(gates, 4, axis=-1)
                i_g = jax.nn.sigmoid(i_g)
                f_g = jax.nn.sigmoid(f_g)
                g_g = jnp.tanh(g_g)
                o_g = jax.nn.sigmoid(o_g)
                c = f_g * c + i_g * g_g
                h = o_g * jnp.tanh(c)
                ys[t] = h
            outs.append(jnp.stack(ys, axis=1))
        h_seq = jnp.concatenate(outs, axis=-1)
    return h_seq[:, -1, :] @ fc_w_t + fc_b


if __name__ == "__main__":
    # Small shapes consistent with the module defaults.
    B, S = 2, 8
    INPUT_SIZE, HIDDEN_SIZE, NUM_LAYERS, OUTPUT_SIZE = 100, 256, 2, 10

    key = jax.random.PRNGKey(0)
    key, xk = jax.random.split(key)
    x = jax.random.normal(xk, (B, S, INPUT_SIZE), dtype=jnp.float32)

    lstm_params, fc_w_t, fc_b = init_params(
        key, INPUT_SIZE, HIDDEN_SIZE, NUM_LAYERS, OUTPUT_SIZE
    )

    out = rnn_model_forward(x, lstm_params, fc_w_t, fc_b)
    out = jax.block_until_ready(out)

    ref = rnn_model_ref(x, lstm_params, fc_w_t, fc_b)
    ref = jax.block_until_ready(ref)

    assert out.shape == (B, OUTPUT_SIZE)
    assert jnp.allclose(out, ref, atol=1e-3, rtol=1e-3), (
        f"max abs diff {jnp.max(jnp.abs(out - ref))}"
    )

    print("KERNEL_OK")
</pallas_src>

<mosaic_0001>
module attributes {stable_mosaic.version = 11 : i64} {
  func.func @_lstm_step_kernel(%arg0: i32, %arg1: memref<1x2x100xf32, #tpu.memory_space<vmem>>, %arg2: memref<100x1024xf32, #tpu.memory_space<vmem>>, %arg3: memref<256x1024xf32, #tpu.memory_space<vmem>>, %arg4: memref<1x1024xf32, #tpu.memory_space<vmem>>, %arg5: memref<1x2x256xf32, #tpu.memory_space<vmem>>, %arg6: memref<2x256xf32, #tpu.memory_space<vmem>>, %arg7: memref<2x256xf32, #tpu.memory_space<vmem>>) attributes {dimension_semantics = [#tpu.dimension_semantics<arbitrary>], iteration_bounds = array<i64: 8>, scalar_prefetch = 0 : i64, scratch_operands = 2 : i64, tpu.core_type = #tpu.core_type<tc>, window_params = [{transform_indices = @transform_0, window_bounds = array<i64: 1, 2, 100>}, {pipeline_mode = #tpu.pipeline_mode<synchronous>, transform_indices = @transform_1, window_bounds = array<i64: 100, 1024>}, {pipeline_mode = #tpu.pipeline_mode<synchronous>, transform_indices = @transform_2, window_bounds = array<i64: 256, 1024>}, {pipeline_mode = #tpu.pipeline_mode<synchronous>, transform_indices = @transform_3, window_bounds = array<i64: 1, 1024>}, {transform_indices = @transform_4, window_bounds = array<i64: 1, 2, 256>}]} {
    %c0_i32 = arith.constant 0 : i32
    %0 = arith.cmpi eq, %arg0, %c0_i32 : i32
    %1 = arith.extui %0 : i1 to i32
    %c0_i32_0 = arith.constant 0 : i32
    %2 = arith.cmpi ne, %1, %c0_i32_0 : i32
    scf.if %2 {
      %cst_24 = arith.constant 0.000000e+00 : f32
      %45 = vector.broadcast %cst_24 : f32 to vector<2x256xf32>
      %c0_25 = arith.constant 0 : index
      %c0_26 = arith.constant 0 : index
      %46 = vector.load %arg6[%c0_25, %c0_26] : memref<2x256xf32, #tpu.memory_space<vmem>>, vector<2x256xf32>
      tpu.vector_store %arg6[%c0_25, %c0_26], %45 {strides = array<i32>} : memref<2x256xf32, #tpu.memory_space<vmem>>, vector<2x256xf32>,
      %cst_27 = arith.constant 0.000000e+00 : f32
      %47 = vector.broadcast %cst_27 : f32 to vector<2x256xf32>
      %c0_28 = arith.constant 0 : index
      %c0_29 = arith.constant 0 : index
      %48 = vector.load %arg7[%c0_28, %c0_29] : memref<2x256xf32, #tpu.memory_space<vmem>>, vector<2x256xf32>
      tpu.vector_store %arg7[%c0_28, %c0_29], %47 {strides = array<i32>} : memref<2x256xf32, #tpu.memory_space<vmem>>, vector<2x256xf32>,
    } else {
    }
    %c0 = arith.constant 0 : index
    %c0_1 = arith.constant 0 : index
    %c0_2 = arith.constant 0 : index
    %3 = vector.load %arg1[%c0, %c0_1, %c0_2] : memref<1x2x100xf32, #tpu.memory_space<vmem>>, vector<1x2x100xf32>
    %4 = vector.shape_cast %3 : vector<1x2x100xf32> to vector<2x100xf32>
    %c0_3 = arith.constant 0 : index
    %c0_4 = arith.constant 0 : index
    %5 = vector.load %arg2[%c0_3, %c0_4] : memref<100x1024xf32, #tpu.memory_space<vmem>>, vector<100x1024xf32>
    %cst = arith.constant dense<0.000000e+00> : vector<2x1024xf32>
    %6 = tpu.matmul %4, %5, %cst {dimension_numbers = #tpu.dot_dimension_numbers<[1], [0], [0], [1], [0, 0, 1, 1], [], []>} : vector<2x100xf32>, vector<100x1024xf32>, vector<2x1024xf32> -> vector<2x1024xf32>
    %c0_5 = arith.constant 0 : index
    %c0_6 = arith.constant 0 : index
    %7 = vector.load %arg6[%c0_5, %c0_6] : memref<2x256xf32, #tpu.memory_space<vmem>>, vector<2x256xf32>
    %c0_7 = arith.constant 0 : index
    %c0_8 = arith.constant 0 : index
    %8 = vector.load %arg3[%c0_7, %c0_8] : memref<256x1024xf32, #tpu.memory_space<vmem>>, vector<256x1024xf32>
    %cst_9 = arith.constant dense<0.000000e+00> : vector<2x1024xf32>
    %9 = tpu.matmul %7, %8, %cst_9 {dimension_numbers = #tpu.dot_dimension_numbers<[1], [0], [0], [1], [0, 0, 1, 1], [], []>} : vector<2x256xf32>, vector<256x1024xf32>, vector<2x1024xf32> -> vector<2x1024xf32>
    %10 = arith.addf %6, %9 : vector<2x1024xf32>
    %c0_10 = arith.constant 0 : index
    %c0_11 = arith.constant 0 : index
    %11 = vector.load %arg4[%c0_10, %c0_11] : memref<1x1024xf32, #tpu.memory_space<vmem>>, vector<1x1024xf32>
    %12 = vector.broadcast %11 : vector<1x1024xf32> to vector<2x1024xf32>
    %13 = arith.addf %10, %12 : vector<2x1024xf32>
    %14 = vector.extract_strided_slice %13 {offsets = [0, 0], sizes = [2, 256], strides = [1, 1]} : vector<2x1024xf32> to vector<2x256xf32>
    %15 = arith.negf %14 : vector<2x256xf32>
    %16 = math.exp %15 : vector<2x256xf32>
    %cst_12 = arith.constant 1.000000e+00 : f32
    %17 = vector.broadcast %cst_12 : f32 to vector<2x256xf32>
    %18 = arith.addf %17, %16 : vector<2x256xf32>
    %19 = arith.divf %17, %18 : vector<2x256xf32>
    %20 = vector.extract_strided_slice %13 {offsets = [0, 256], sizes = [2, 256], strides = [1, 1]} : vector<2x1024xf32> to vector<2x256xf32>
    %21 = arith.negf %20 : vector<2x256xf32>
    %22 = math.exp %21 : vector<2x256xf32>
    %cst_13 = arith.constant 1.000000e+00 : f32
    %23 = vector.broadcast %cst_13 : f32 to vector<2x256xf32>
    %24 = arith.addf %23, %22 : vector<2x256xf32>
    %25 = arith.divf %23, %24 : vector<2x256xf32>
    %26 = vector.extract_strided_slice %13 {offsets = [0, 512], sizes = [2, 256], strides = [1, 1]} : vector<2x1024xf32> to vector<2x256xf32>
    %27 = math.tanh %26 : vector<2x256xf32>
    %28 = vector.extract_strided_slice %13 {offsets = [0, 768], sizes = [2, 256], strides = [1, 1]} : vector<2x1024xf32> to vector<2x256xf32>
    %29 = arith.negf %28 : vector<2x256xf32>
    %30 = math.exp %29 : vector<2x256xf32>
    %cst_14 = arith.constant 1.000000e+00 : f32
    %31 = vector.broadcast %cst_14 : f32 to vector<2x256xf32>
    %32 = arith.addf %31, %30 : vector<2x256xf32>
    %33 = arith.divf %31, %32 : vector<2x256xf32>
    %c0_15 = arith.constant 0 : index
    %c0_16 = arith.constant 0 : index
    %34 = vector.load %arg7[%c0_15, %c0_16] : memref<2x256xf32, #tpu.memory_space<vmem>>, vector<2x256xf32>
    %35 = arith.mulf %25, %34 : vector<2x256xf32>
    %36 = arith.mulf %19, %27 : vector<2x256xf32>
    %37 = arith.addf %35, %36 : vector<2x256xf32>
    %38 = math.tanh %37 : vector<2x256xf32>
    %39 = arith.mulf %33, %38 : vector<2x256xf32>
    %c0_17 = arith.constant 0 : index
    %c0_18 = arith.constant 0 : index
    %40 = vector.load %arg7[%c0_17, %c0_18] : memref<2x256xf32, #tpu.memory_space<vmem>>, vector<2x256xf32>
    tpu.vector_store %arg7[%c0_17, %c0_18], %37 {strides = array<i32>} : memref<2x256xf32, #tpu.memory_space<vmem>>, vector<2x256xf32>,
    %c0_19 = arith.constant 0 : index
    %c0_20 = arith.constant 0 : index
    %41 = vector.load %arg6[%c0_19, %c0_20] : memref<2x256xf32, #tpu.memory_space<vmem>>, vector<2x256xf32>
    tpu.vector_store %arg6[%c0_19, %c0_20], %39 {strides = array<i32>} : memref<2x256xf32, #tpu.memory_space<vmem>>, vector<2x256xf32>,
    %c0_21 = arith.constant 0 : index
    %c0_22 = arith.constant 0 : index
    %c0_23 = arith.constant 0 : index
    %42 = vector.load %arg5[%c0_21, %c0_22, %c0_23] : memref<1x2x256xf32, #tpu.memory_space<vmem>>, vector<1x2x256xf32>
    %43 = vector.shape_cast %42 : vector<1x2x256xf32> to vector<2x256xf32>
    %44 = vector.shape_cast %39 : vector<2x256xf32> to vector<1x2x256xf32>
    tpu.vector_store %arg5[%c0_21, %c0_22, %c0_23], %44 {strides = array<i32>} : memref<1x2x256xf32, #tpu.memory_space<vmem>>, vector<1x2x256xf32>,
    return
  }
  func.func @transform_0(%arg0: i32) -> (i32, i32, i32) {
    %c0_i32 = arith.constant 0 : i32
    %c0_i32_0 = arith.constant 0 : i32
    %c0_i32_1 = arith.constant 0 : i32
    return %arg0, %c0_i32, %c0_i32_0 : i32, i32, i32
  }
  func.func @transform_1(%arg0: i32) -> (i32, i32) {
    %c0_i32 = arith.constant 0 : i32
    %c0_i32_0 = arith.constant 0 : i32
    %c0_i32_1 = arith.constant 0 : i32
    return %c0_i32, %c0_i32_0 : i32, i32
  }
  func.func @transform_2(%arg0: i32) -> (i32, i32) {
    %c0_i32 = arith.constant 0 : i32
    %c0_i32_0 = arith.constant 0 : i32
    %c0_i32_1 = arith.constant 0 : i32
    return %c0_i32, %c0_i32_0 : i32, i32
  }
  func.func @transform_3(%arg0: i32) -> (i32, i32) {
    %c0_i32 = arith.constant 0 : i32
    %c0_i32_0 = arith.constant 0 : i32
    %c0_i32_1 = arith.constant 0 : i32
    return %c0_i32, %c0_i32_0 : i32, i32
  }
  func.func @transform_4(%arg0: i32) -> (i32, i32, i32) {
    %c0_i32 = arith.constant 0 : i32
    %c0_i32_0 = arith.constant 0 : i32
    %c0_i32_1 = arith.constant 0 : i32
    return %arg0, %c0_i32, %c0_i32_0 : i32, i32, i32
  }
}

</mosaic_0001>

<llo_original>
// kernel: tpu_custom_call.1
$region0: #{tpu_custom_call.1}
  #allocation0 [shape = 'u32[]', space=smem, size = 0x4, offset = 0x4, fixed_abs, tag = 'smem constant byte address 0x4 - core index']
  #allocation1 [shape = 'u32[144,128]{1,0:T(1,128)}', space=vmem, size = 0x12000, scoped, tag = 'internal scratch']
  #allocation2 [shape = 'f32[2,256]{1,0:T(2,128)}', space=vmem, size = 0x800, scoped, tag = 'scratch operand']
  #allocation3 [shape = 'f32[2,256]{1,0:T(2,128)}', space=vmem, size = 0x800, scoped, tag = 'scratch operand']
  %s0 = inlined_call_operand.hbm [shape: f32[8,2,100], index: 0, kind: input, shape index: {}]
  %s1 = inlined_call_operand.hbm [shape: f32[100,1024], index: 1, kind: input, shape index: {}]
  %s2 = inlined_call_operand.hbm [shape: f32[256,1024], index: 2, kind: input, shape index: {}]
  %s3 = inlined_call_operand.hbm [shape: f32[1,1024], index: 3, kind: input, shape index: {}]
  %s4 = inlined_call_operand.hbm [shape: f32[8,2,256], index: 4, kind: output, shape index: {}]
  %s5 = sld [smem:[#allocation0]]
  $region69: #{tpu_custom_call.1} parent=0
    _
  %s7 = ssub.s32 1, %s5
  %s8 = scalar_select 0, %s7, %s5
  $region1: #{tpu_custom_call.1} parent=0
    #allocation4 [shape = 'u8[2048]{0}', space=vmem, size = 0x800, scoped, tag = 'input window, operand 0']
    #allocation5 [shape = 's32[2]{0}', space=sflag, size = 0x8, scoped, tag = 'scoped memory for tpu_custom_call.1']
    #allocation6 [shape = 's32[2]{0}', space=sflag, size = 0x8, scoped, tag = 'scoped memory for tpu_custom_call.1']
    #allocation7 [shape = 'u8[425984]{0}', space=vmem, size = 0x68000, scoped, tag = 'input window, operand 1, single buffered']
    #allocation8 [shape = 's32[1]{0}', space=sflag, size = 0x4, scoped, tag = 'scoped memory for tpu_custom_call.1']
    #allocation9 [shape = 'u8[1048576]{0}', space=vmem, size = 0x100000, scoped, tag = 'input window, operand 2, single buffered']
    #allocation10 [shape = 'u8[4096]{0}', space=vmem, size = 0x1000, scoped, tag = 'input window, operand 3, single buffered']
    #allocation11 [shape = 's32[1]{0}', space=sflag, size = 0x4, scoped, tag = 'scoped memory for tpu_custom_call.1']
    #allocation12 [shape = 'u8[4096]{0}', space=vmem, size = 0x1000, scoped, tag = 'output window, operand 0']
    %9 = vsyncpa [#allocation5], 0
    %s10 = scalar_lea.sflag [#allocation5], 1
    %11 = vsyncpa %s10, 0
    %12 = vsyncpa [#allocation8], 0
    %13 = vsyncpa [#allocation11], 0
    %14 = vsyncpa [#allocation6], 0
    %s15 = scalar_lea.sflag [#allocation6], 1
    %16 = vsyncpa %s15, 0
    loop: start=0, step=1, limit=10
    $region2: #{tpu_custom_call.1} parent=1 // loop_pre_header
      _
    $region3: #{tpu_custom_call.1} parent=1 // loop_header
      %s18 = sphi 0, %s22
      %p19 = scmp.ge.s32.totalorder %s18, 10
      %s28 = sphi 0, %s30
      %s31 = sphi 0, %s28
      %s32 = sphi 0, %s31
      %s48 = sphi 0, %s32
      %s52 = sphi 0, %s52
      %s54 = sphi 0, %s52
      %s55 = sphi 0, %s54
      %s69 = sphi 0, %s55
      %s73 = sphi 0, %s73
      %s75 = sphi 0, %s73
      %s76 = sphi 0, %s75
      %s90 = sphi 0, %s76
      %s94 = sphi 0, %s94
      %s96 = sphi 0, %s94
      %s97 = sphi 0, %s96
      %s111 = sphi 0, %s97
      %s117 = sphi 0, %s119
      %s120 = sphi 0, %s117
      %s121 = sphi 0, %s120
      %s137 = sphi 0, %s121
    $region4: #{tpu_custom_call.1} parent=1 // loop_header_branch
      %21 = sbr.rel (%p19) target = $region8
    $region5: #{tpu_custom_call.1} parent=1 // loop_body
      %s23 = ssub.s32 %s18, 1
      %s24 = ssub.s32 %s18, 2
      %s25 = sadd.s32 %s18, 1
      %s26 = ssub.s32 %s18, %s25
      %p27 = scmp.eq.s32.totalorder %s26, 0
      %s29 = sadd.s32 %s28, 1
      %s30 = scalar_select %p27, %s28, %s29
      %p33 = pneg %p27
      %p34 = scmp.eq.s32.totalorder %s18, 7
      %p35 = por %p33, %p34
      %p36 = scmp.ne.s32.totalorder %s28, %s31
      %p37 = scmp.eq.s32.totalorder %s18, 0
      %p38 = por %p36, %p37
      %p39 = scmp.ne.s32.totalorder %s28, %s31
      %p40 = scmp.eq.s32.totalorder %s23, 7
      %p41 = por %p39, %p40
      %p42 = scmp.ne.s32.totalorder %s31, %s32
      %p43 = scmp.eq.s32.totalorder %s23, 0
      %p44 = por %p42, %p43
      %p45 = scmp.ne.s32.totalorder %s31, %s32
      %p46 = scmp.eq.s32.totalorder %s24, 7
      %p47 = por %p45, %p46
      %p49 = scmp.ne.s32.totalorder %s32, %s48
      %p50 = scmp.eq.s32.totalorder %s24, 0
      %p51 = por %p49, %p50
      %s53 = sadd.s32 %s52, 1
      %p56 = scmp.eq.s32.totalorder %s18, 7
      %p57 = scmp.ne.s32.totalorder %s52, %s54
      %p58 = scmp.eq.s32.totalorder %s18, 0
      %p59 = por %p57, %p58
      %p60 = scmp.ne.s32.totalorder %s52, %s54
      %p61 = scmp.eq.s32.totalorder %s23, 7
      %p62 = por %p60, %p61
      %p63 = scmp.ne.s32.totalorder %s54, %s55
      %p64 = scmp.eq.s32.totalorder %s23, 0
      %p65 = por %p63, %p64
      %p66 = scmp.ne.s32.totalorder %s54, %s55
      %p67 = scmp.eq.s32.totalorder %s24, 7
      %p68 = por %p66, %p67
      %p70 = scmp.ne.s32.totalorder %s55, %s69
      %p71 = scmp.eq.s32.totalorder %s24, 0
      %p72 = por %p70, %p71
      %s74 = sadd.s32 %s73, 1
      %p77 = scmp.eq.s32.totalorder %s18, 7
      %p78 = scmp.ne.s32.totalorder %s73, %s75
      %p79 = scmp.eq.s32.totalorder %s18, 0
      %p80 = por %p78, %p79
      %p81 = scmp.ne.s32.totalorder %s73, %s75
      %p82 = scmp.eq.s32.totalorder %s23, 7
      %p83 = por %p81, %p82
      %p84 = scmp.ne.s32.totalorder %s75, %s76
      %p85 = scmp.eq.s32.totalorder %s23, 0
      %p86 = por %p84, %p85
      %p87 = scmp.ne.s32.totalorder %s75, %s76
      %p88 = scmp.eq.s32.totalorder %s24, 7
      %p89 = por %p87, %p88
      %p91 = scmp.ne.s32.totalorder %s76, %s90
      %p92 = scmp.eq.s32.totalorder %s24, 0
      %p93 = por %p91, %p92
      %s95 = sadd.s32 %s94, 1
      %p98 = scmp.eq.s32.totalorder %s18, 7
      %p99 = scmp.ne.s32.totalorder %s94, %s96
      %p100 = scmp.eq.s32.totalorder %s18, 0
      %p101 = por %p99, %p100
      %p102 = scmp.ne.s32.totalorder %s94, %s96
      %p103 = scmp.eq.s32.totalorder %s23, 7
      %p104 = por %p102, %p103
      %p105 = scmp.ne.s32.totalorder %s96, %s97
      %p106 = scmp.eq.s32.totalorder %s23, 0
      %p107 = por %p105, %p106
      %p108 = scmp.ne.s32.totalorder %s96, %s97
      %p109 = scmp.eq.s32.totalorder %s24, 7
      %p110 = por %p108, %p109
      %p112 = scmp.ne.s32.totalorder %s97, %s111
      %p113 = scmp.eq.s32.totalorder %s24, 0
      %p114 = por %p112, %p113
      %s115 = ssub.s32 %s18, %s25
      %p116 = scmp.eq.s32.totalorder %s115, 0
      %s118 = sadd.s32 %s117, 1
      %s119 = scalar_select %p116, %s117, %s118
      %p122 = pneg %p116
      %p123 = scmp.eq.s32.totalorder %s18, 7
      %p124 = por %p122, %p123
      %p125 = scmp.ne.s32.totalorder %s117, %s120
      %p126 = scmp.eq.s32.totalorder %s18, 0
      %p127 = por %p125, %p126
      %p128 = scmp.ne.s32.totalorder %s117, %s120
      %p129 = scmp.eq.s32.totalorder %s23, 7
      %p130 = por %p128, %p129
      %p131 = scmp.ne.s32.totalorder %s120, %s121
      %p132 = scmp.eq.s32.totalorder %s23, 0
      %p133 = por %p131, %p132
      %p134 = scmp.ne.s32.totalorder %s120, %s121
      %p135 = scmp.eq.s32.totalorder %s24, 7
      %p136 = por %p134, %p135
      %p138 = scmp.ne.s32.totalorder %s121, %s137
      %p139 = scmp.eq.s32.totalorder %s24, 0
      %p140 = por %p138, %p139
      %p141 = scmp.le.s32.totalorder 1, %s18
      %p142 = scmp.lt.s32.totalorder %s18, 9
      %p143 = pnand %p141, %p142
      %p144 = pneg %p143
      // Predicated region
      $region9: #{tpu_custom_call.1} parent=5 // pred_check
        _
      $region10: #{tpu_custom_call.1} parent=5 // pred_check_branch
        %146 = sbr.rel (%p143) target = $region12
      $region11: #{tpu_custom_call.1} parent=5 // pred_region
        %s147 = ssub.s32 %s18, 1
        // Predicated region
        $region13: #{tpu_custom_call.1} parent=11 // pred_check
          %p148 = pneg %p65
        $region14: #{tpu_custom_call.1} parent=11 // pred_check_branch
          %150 = sbr.rel (%p148) target = $region16
        $region15: #{tpu_custom_call.1} parent=11 // pred_region
          %s152 = ssub.s32 13312, 13312
          %153 = vsyncadd [#allocation8], %s152
          %s154 = sshll.u32 [#allocation7], 4
          %s155 = int_to_ptr.vmem [resolvable:$true] %s154
          %160 = dma.hbm_to_vmem [thread:$0]  %s1, 13312, %s155, [#allocation8], 1024, 1024, 64
        $region16: #{tpu_custom_call.1} parent=11 // pred_fallthru
          _
        // Predicated region
        $region17: #{tpu_custom_call.1} parent=11 // pred_check
          %p161 = pneg %p86
        $region18: #{tpu_custom_call.1} parent=11 // pred_check_branch
          %163 = sbr.rel (%p161) target = $region20
        $region19: #{tpu_custom_call.1} parent=11 // pred_region
          %s165 = ssub.s32 32768, 32768
          %166 = vsyncadd [#allocation8], %s165
          %s167 = sshll.u32 [#allocation9], 4
          %s168 = int_to_ptr.vmem [resolvable:$true] %s167
          %173 = dma.hbm_to_vmem [thread:$0]  %s2, 32768, %s168, [#allocation8], 1024, 1024, 64
        $region20: #{tpu_custom_call.1} parent=11 // pred_fallthru
          _
        // Predicated region
        $region21: #{tpu_custom_call.1} parent=11 // pred_check
          %p174 = pneg %p107
        $region22: #{tpu_custom_call.1} parent=11 // pred_check_branch
          %176 = sbr.rel (%p174) target = $region24
        $region23: #{tpu_custom_call.1} parent=11 // pred_region
          %s178 = ssub.s32 128, 128
          %179 = vsyncadd [#allocation11], %s178
          %s181 = sshll.u32 [#allocation10], 4
          %s182 = int_to_ptr.vmem [resolvable:$true] %s181
          %184 = dma.hbm_to_vmem [thread:$0]  %s3, 128, %s182, [#allocation11]
        $region24: #{tpu_custom_call.1} parent=11 // pred_fallthru
          _
      $region12: #{tpu_custom_call.1} parent=5 // pred_fallthru
        _
      %p185 = scmp.lt.s32.totalorder %s18, 8
      // Predicated region
      $region25: #{tpu_custom_call.1} parent=5 // pred_check
        %p186 = pneg %p185
      $region26: #{tpu_custom_call.1} parent=5 // pred_check_branch
        %188 = sbr.rel (%p186) target = $region28
      $region27: #{tpu_custom_call.1} parent=5 // pred_region
        // Predicated region
        $region29: #{tpu_custom_call.1} parent=27 // pred_check
          %p189 = pneg %p38
        $region30: #{tpu_custom_call.1} parent=27 // pred_check_branch
          %191 = sbr.rel (%p189) target = $region32
        $region31: #{tpu_custom_call.1} parent=27 // pred_region
          %s192 = sand.u32 %s28, 1
          %s193 = scalar_lea.sflag [#allocation5], %s192
          %s194 = sand.u32 %s28, 1
          %s195 = smul.addr %s194, 2
          %s196 = scalar_lea.vmem [#allocation4], %s195
          %s198 = ssub.s32 32, 32
          %199 = vsyncadd %s193, %s198
          %s200 = smul.addr %s18, 32
          %s201 = scalar_lea.hbm %s0, %s200
          %s203 = sshll.u32 %s196, 4
          %s204 = int_to_ptr.vmem [resolvable:$true] %s203
          %206 = dma.hbm_to_vmem [thread:$0]  %s201, 32, %s204, %s193
        $region32: #{tpu_custom_call.1} parent=27 // pred_fallthru
          _
      $region28: #{tpu_custom_call.1} parent=5 // pred_fallthru
        _
      %p207 = scmp.le.s32.totalorder 1, %s18
      %p208 = scmp.lt.s32.totalorder %s18, 9
      %p209 = pnand %p207, %p208
      %p210 = pneg %p209
      // Predicated region
      $region33: #{tpu_custom_call.1} parent=5 // pred_check
        _
      $region34: #{tpu_custom_call.1} parent=5 // pred_check_branch
        %212 = sbr.rel (%p209) target = $region36
      $region35: #{tpu_custom_call.1} parent=5 // pred_region
        %s213 = ssub.s32 %s18, 1
        %s214 = sand.u32 %s31, 1
        %s215 = scalar_lea.sflag [#allocation5], %s214
        %s216 = sand.u32 %s31, 1
        %s217 = smul.addr %s216, 2
        %s218 = scalar_lea.vmem [#allocation4], %s217
        // Predicated region
        $region37: #{tpu_custom_call.1} parent=35 // pred_check
          %p219 = pneg %p44
        $region38: #{tpu_custom_call.1} parent=35 // pred_check_branch
          %221 = sbr.rel (%p219) target = $region40
        $region39: #{tpu_custom_call.1} parent=35 // pred_region
          %222 = dma.done %s215, 32
        $region40: #{tpu_custom_call.1} parent=35 // pred_fallthru
          _
        // Predicated region
        $region41: #{tpu_custom_call.1} parent=35 // pred_check
          %p223 = pneg %p65
        $region42: #{tpu_custom_call.1} parent=35 // pred_check_branch
          %225 = sbr.rel (%p223) target = $region44
        $region43: #{tpu_custom_call.1} parent=35 // pred_region
          %226 = dma.done [#allocation8], 13312
        $region44: #{tpu_custom_call.1} parent=35 // pred_fallthru
          _
        // Predicated region
        $region45: #{tpu_custom_call.1} parent=35 // pred_check
          %p227 = pneg %p86
        $region46: #{tpu_custom_call.1} parent=35 // pred_check_branch
          %229 = sbr.rel (%p227) target = $region48
        $region47: #{tpu_custom_call.1} parent=35 // pred_region
          %230 = dma.done [#allocation8], 32768
        $region48: #{tpu_custom_call.1} parent=35 // pred_fallthru
          _
        // Predicated region
        $region49: #{tpu_custom_call.1} parent=35 // pred_check
          %p231 = pneg %p107
        $region50: #{tpu_custom_call.1} parent=35 // pred_check_branch
          %233 = sbr.rel (%p231) target = $region52
        $region51: #{tpu_custom_call.1} parent=35 // pred_region
          %234 = dma.done [#allocation11], 128
        $region52: #{tpu_custom_call.1} parent=35 // pred_fallthru
          _
        %s235 = sand.u32 %s31, 1
        %s236 = scalar_lea.sflag [#allocation5], %s235
        %s237 = sand.u32 %s31, 1
        %s238 = smul.addr %s237, 2
        %s239 = scalar_lea.vmem [#allocation4], %s238
        %p240 = pneg %p44
        %p241 = pneg %p41
        %p242 = pneg %p65
        %p243 = pneg %p62
        %p244 = pneg %p86
        %p245 = pneg %p83
        %p246 = pneg %p107
        %p247 = pneg %p104
        %p248 = pneg %p133
        %p249 = pneg %p130
        %s250 = sand.u32 %s120, 1
        %s251 = scalar_lea.sflag [#allocation6], %s250
        %s252 = sand.u32 %s120, 1
        %s253 = smul.addr %s252, 4
        %s254 = scalar_lea.vmem [#allocation12], %s253
        %p255 = scmp.eq.s32.totalorder %s23, 0
        // Predicated region
        $region53: #{tpu_custom_call.1} parent=35 // pred_check
          %p256 = pneg %p255
        $region54: #{tpu_custom_call.1} parent=35 // pred_check_branch
          %258 = sbr.rel (%p256) target = $region56
        $region55: #{tpu_custom_call.1} parent=35 // pred_region
          %259 = vst [vmem:[#allocation2] sm:$0xf] 0.0
          %260 = vst [vmem:[#allocation3] sm:$0xf] 0.0
        $region56: #{tpu_custom_call.1} parent=35 // pred_fallthru
          _
        %v261 = vld [vmem:[%s218] sm:$0x3]
        %v262 = vld [vmem:[#allocation7] sm:$0xff]
        %v263 = vld [vmem:[#allocation7 + $0x8] sm:$0xff]
        %v264 = vld [vmem:[#allocation7 + $0x10] sm:$0xff]
        %v265 = vld [vmem:[#allocation7 + $0x18] sm:$0xff]
        %v266 = vld [vmem:[#allocation7 + $0x20] sm:$0xff]
        %v267 = vld [vmem:[#allocation7 + $0x28] sm:$0xff]
        %v268 = vld [vmem:[#allocation7 + $0x30] sm:$0xff]
        %v269 = vld [vmem:[#allocation7 + $0x38] sm:$0xff]
        %v270 = vld [vmem:[#allocation7 + $0x40] sm:$0xff]
        %v271 = vld [vmem:[#allocation7 + $0x48] sm:$0xff]
        %v272 = vld [vmem:[#allocation7 + $0x50] sm:$0xff]
        %v273 = vld [vmem:[#allocation7 + $0x58] sm:$0xff]
        %v274 = vld [vmem:[#allocation7 + $0x60] sm:$0xff]
        %v275 = vld [vmem:[#allocation7 + $0x68] sm:$0xff]
        %v276 = vld [vmem:[#allocation7 + $0x70] sm:$0xff]
        %v277 = vld [vmem:[#allocation7 + $0x78] sm:$0xff]
        %v278 = vld [vmem:[#allocation7 + $0x80] sm:$0xff]
        %v279 = vld [vmem:[#allocation7 + $0x88] sm:$0xff]
        %v280 = vld [vmem:[#allocation7 + $0x90] sm:$0xff]
        %v281 = vld [vmem:[#allocation7 + $0x98] sm:$0xff]
        %v282 = vld [vmem:[#allocation7 + $0xa0] sm:$0xff]
        %v283 = vld [vmem:[#allocation7 + $0xa8] sm:$0xff]
        %v284 = vld [vmem:[#allocation7 + $0xb0] sm:$0xff]
        %v285 = vld [vmem:[#allocation7 + $0xb8] sm:$0xff]
        %v286 = vld [vmem:[#allocation7 + $0xc0] sm:$0xff]
        %v287 = vld [vmem:[#allocation7 + $0xc8] sm:$0xff]
        %v288 = vld [vmem:[#allocation7 + $0xd0] sm:$0xff]
        %v289 = vld [vmem:[#allocation7 + $0xd8] sm:$0xff]
        %v290 = vld [vmem:[#allocation7 + $0xe0] sm:$0xff]
        %v291 = vld [vmem:[#allocation7 + $0xe8] sm:$0xff]
        %v292 = vld [vmem:[#allocation7 + $0xf0] sm:$0xff]
        %v293 = vld [vmem:[#allocation7 + $0xf8] sm:$0xff]
        %v294 = vld [vmem:[#allocation7 + $0x100] sm:$0xff]
        %v295 = vld [vmem:[#allocation7 + $0x108] sm:$0xff]
        %v296 = vld [vmem:[#allocation7 + $0x110] sm:$0xff]
        %v297 = vld [vmem:[#allocation7 + $0x118] sm:$0xff]
        %v298 = vld [vmem:[#allocation7 + $0x120] sm:$0xff]
        %v299 = vld [vmem:[#allocation7 + $0x128] sm:$0xff]
        %v300 = vld [vmem:[#allocation7 + $0x130] sm:$0xff]
        %v301 = vld [vmem:[#allocation7 + $0x138] sm:$0xff]
        %v302 = vld [vmem:[#allocation7 + $0x140] sm:$0xff]
        %v303 = vld [vmem:[#allocation7 + $0x148] sm:$0xff]
        %v304 = vld [vmem:[#allocation7 + $0x150] sm:$0xff]
        %v305 = vld [vmem:[#allocation7 + $0x158] sm:$0xff]
        %v306 = vld [vmem:[#allocation7 + $0x160] sm:$0xff]
        %v307 = vld [vmem:[#allocation7 + $0x168] sm:$0xff]
        %v308 = vld [vmem:[#allocation7 + $0x170] sm:$0xff]
        %v309 = vld [vmem:[#allocation7 + $0x178] sm:$0xff]
        %v310 = vld [vmem:[#allocation7 + $0x180] sm:$0xff]
        %v311 = vld [vmem:[#allocation7 + $0x188] sm:$0xff]
        %v312 = vld [vmem:[#allocation7 + $0x190] sm:$0xff]
        %v313 = vld [vmem:[#allocation7 + $0x198] sm:$0xff]
        %v314 = vld [vmem:[#allocation7 + $0x1a0] sm:$0xff]
        %v315 = vld [vmem:[#allocation7 + $0x1a8] sm:$0xff]
        %v316 = vld [vmem:[#allocation7 + $0x1b0] sm:$0xff]
        %v317 = vld [vmem:[#allocation7 + $0x1b8] sm:$0xff]
        %v318 = vld [vmem:[#allocation7 + $0x1c0] sm:$0xff]
        %v319 = vld [vmem:[#allocation7 + $0x1c8] sm:$0xff]
        %v320 = vld [vmem:[#allocation7 + $0x1d0] sm:$0xff]
        %v321 = vld [vmem:[#allocation7 + $0x1d8] sm:$0xff]
        %v322 = vld [vmem:[#allocation7 + $0x1e0] sm:$0xff]
        %v323 = vld [vmem:[#allocation7 + $0x1e8] sm:$0xff]
        %v324 = vld [vmem:[#allocation7 + $0x1f0] sm:$0xff]
        %v325 = vld [vmem:[#allocation7 + $0x1f8] sm:$0xff]
        %v326 = vld [vmem:[#allocation7 + $0x200] sm:$0xff]
        %v327 = vld [vmem:[#allocation7 + $0x208] sm:$0xff]
        %v328 = vld [vmem:[#allocation7 + $0x210] sm:$0xff]
        %v329 = vld [vmem:[#allocation7 + $0x218] sm:$0xff]
        %v330 = vld [vmem:[#allocation7 + $0x220] sm:$0xff]
        %v331 = vld [vmem:[#allocation7 + $0x228] sm:$0xff]
        %v332 = vld [vmem:[#allocation7 + $0x230] sm:$0xff]
        %v333 = vld [vmem:[#allocation7 + $0x238] sm:$0xff]
        %v334 = vld [vmem:[#allocation7 + $0x240] sm:$0xff]
        %v335 = vld [vmem:[#allocation7 + $0x248] sm:$0xff]
        %v336 = vld [vmem:[#allocation7 + $0x250] sm:$0xff]
        %v337 = vld [vmem:[#allocation7 + $0x258] sm:$0xff]
        %v338 = vld [vmem:[#allocation7 + $0x260] sm:$0xff]
        %v339 = vld [vmem:[#allocation7 + $0x268] sm:$0xff]
        %v340 = vld [vmem:[#allocation7 + $0x270] sm:$0xff]
        %v341 = vld [vmem:[#allocation7 + $0x278] sm:$0xff]
        %v342 = vld [vmem:[#allocation7 + $0x280] sm:$0xff]
        %v343 = vld [vmem:[#allocation7 + $0x288] sm:$0xff]
        %v344 = vld [vmem:[#allocation7 + $0x290] sm:$0xff]
        %v345 = vld [vmem:[#allocation7 + $0x298] sm:$0xff]
        %v346 = vld [vmem:[#allocation7 + $0x2a0] sm:$0xff]
        %v347 = vld [vmem:[#allocation7 + $0x2a8] sm:$0xff]
        %v348 = vld [vmem:[#allocation7 + $0x2b0] sm:$0xff]
        %v349 = vld [vmem:[#allocation7 + $0x2b8] sm:$0xff]
        %v350 = vld [vmem:[#allocation7 + $0x2c0] sm:$0xff]
        %v351 = vld [vmem:[#allocation7 + $0x2c8] sm:$0xff]
        %v352 = vld [vmem:[#allocation7 + $0x2d0] sm:$0xff]
        %v353 = vld [vmem:[#allocation7 + $0x2d8] sm:$0xff]
        %v354 = vld [vmem:[#allocation7 + $0x2e0] sm:$0xff]
        %v355 = vld [vmem:[#allocation7 + $0x2e8] sm:$0xff]
        %v356 = vld [vmem:[#allocation7 + $0x2f0] sm:$0xff]
        %v357 = vld [vmem:[#allocation7 + $0x2f8] sm:$0xff]
        %v358 = vld [vmem:[#allocation7 + $0x300] sm:$0xf]
        %v359 = vld [vmem:[#allocation7 + $0x308] sm:$0xf]
        %v360 = vld [vmem:[#allocation7 + $0x310] sm:$0xf]
        %v361 = vld [vmem:[#allocation7 + $0x318] sm:$0xf]
        %v362 = vld [vmem:[#allocation7 + $0x320] sm:$0xf]
        %v363 = vld [vmem:[#allocation7 + $0x328] sm:$0xf]
        %v364 = vld [vmem:[#allocation7 + $0x330] sm:$0xf]
        %v365 = vld [vmem:[#allocation7 + $0x338] sm:$0xf]
        %v366 = vld [vmem:[#allocation2] sm:$0xf]
        %v367 = vld [vmem:[#allocation9] sm:$0xff]
        %v368 = vld [vmem:[#allocation9 + $0x8] sm:$0xff]
        %v369 = vld [vmem:[#allocation9 + $0x10] sm:$0xff]
        %v370 = vld [vmem:[#allocation9 + $0x18] sm:$0xff]
        %v371 = vld [vmem:[#allocation9 + $0x20] sm:$0xff]
        %v372 = vld [vmem:[#allocation9 + $0x28] sm:$0xff]
        %v373 = vld [vmem:[#allocation9 + $0x30] sm:$0xff]
        %v374 = vld [vmem:[#allocation9 + $0x38] sm:$0xff]
        %v375 = vld [vmem:[#allocation9 + $0x40] sm:$0xff]
        %v376 = vld [vmem:[#allocation9 + $0x48] sm:$0xff]
        %v377 = vld [vmem:[#allocation9 + $0x50] sm:$0xff]
        %v378 = vld [vmem:[#allocation9 + $0x58] sm:$0xff]
        %v379 = vld [vmem:[#allocation9 + $0x60] sm:$0xff]
        %v380 = vld [vmem:[#allocation9 + $0x68] sm:$0xff]
        %v381 = vld [vmem:[#allocation9 + $0x70] sm:$0xff]
        %v382 = vld [vmem:[#allocation9 + $0x78] sm:$0xff]
        %v383 = vld [vmem:[#allocation9 + $0x80] sm:$0xff]
        %v384 = vld [vmem:[#allocation9 + $0x88] sm:$0xff]
        %v385 = vld [vmem:[#allocation9 + $0x90] sm:$0xff]
        %v386 = vld [vmem:[#allocation9 + $0x98] sm:$0xff]
        %v387 = vld [vmem:[#allocation9 + $0xa0] sm:$0xff]
        %v388 = vld [vmem:[#allocation9 + $0xa8] sm:$0xff]
        %v389 = vld [vmem:[#allocation9 + $0xb0] sm:$0xff]
        %v390 = vld [vmem:[#allocation9 + $0xb8] sm:$0xff]
        %v391 = vld [vmem:[#allocation9 + $0xc0] sm:$0xff]
        %v392 = vld [vmem:[#allocation9 + $0xc8] sm:$0xff]
        %v393 = vld [vmem:[#allocation9 + $0xd0] sm:$0xff]
        %v394 = vld [vmem:[#allocation9 + $0xd8] sm:$0xff]
        %v395 = vld [vmem:[#allocation9 + $0xe0] sm:$0xff]
        %v396 = vld [vmem:[#allocation9 + $0xe8] sm:$0xff]
        %v397 = vld [vmem:[#allocation9 + $0xf0] sm:$0xff]
        %v398 = vld [vmem:[#allocation9 + $0xf8] sm:$0xff]
        %v399 = vld [vmem:[#allocation9 + $0x100] sm:$0xff]
        %v400 = vld [vmem:[#allocation9 + $0x108] sm:$0xff]
        %v401 = vld [vmem:[#allocation9 + $0x110] sm:$0xff]
        %v402 = vld [vmem:[#allocation9 + $0x118] sm:$0xff]
        %v403 = vld [vmem:[#allocation9 + $0x120] sm:$0xff]
        %v404 = vld [vmem:[#allocation9 + $0x128] sm:$0xff]
        %v405 = vld [vmem:[#allocation9 + $0x130] sm:$0xff]
        %v406 = vld [vmem:[#allocation9 + $0x138] sm:$0xff]
        %v407 = vld [vmem:[#allocation9 + $0x140] sm:$0xff]
        %v408 = vld [vmem:[#allocation9 + $0x148] sm:$0xff]
        %v409 = vld [vmem:[#allocation9 + $0x150] sm:$0xff]
        %v410 = vld [vmem:[#allocation9 + $0x158] sm:$0xff]
        %v411 = vld [vmem:[#allocation9 + $0x160] sm:$0xff]
        %v412 = vld [vmem:[#allocation9 + $0x168] sm:$0xff]
        %v413 = vld [vmem:[#allocation9 + $0x170] sm:$0xff]
        %v414 = vld [vmem:[#allocation9 + $0x178] sm:$0xff]
        %v415 = vld [vmem:[#allocation9 + $0x180] sm:$0xff]
        %v416 = vld [vmem:[#allocation9 + $0x188] sm:$0xff]
        %v417 = vld [vmem:[#allocation9 + $0x190] sm:$0xff]
        %v418 = vld [vmem:[#allocation9 + $0x198] sm:$0xff]
        %v419 = vld [vmem:[#allocation9 + $0x1a0] sm:$0xff]
        %v420 = vld [vmem:[#allocation9 + $0x1a8] sm:$0xff]
        %v421 = vld [vmem:[#allocation9 + $0x1b0] sm:$0xff]
        %v422 = vld [vmem:[#allocation9 + $0x1b8] sm:$0xff]
        %v423 = vld [vmem:[#allocation9 + $0x1c0] sm:$0xff]
        %v424 = vld [vmem:[#allocation9 + $0x1c8] sm:$0xff]
        %v425 = vld [vmem:[#allocation9 + $0x1d0] sm:$0xff]
        %v426 = vld [vmem:[#allocation9 + $0x1d8] sm:$0xff]
        %v427 = vld [vmem:[#allocation9 + $0x1e0] sm:$0xff]
        %v428 = vld [vmem:[#allocation9 + $0x1e8] sm:$0xff]
        %v429 = vld [vmem:[#allocation9 + $0x1f0] sm:$0xff]
        %v430 = vld [vmem:[#allocation9 + $0x1f8] sm:$0xff]
        %v431 = vld [vmem:[#allocation9 + $0x200] sm:$0xff]
        %v432 = vld [vmem:[#allocation9 + $0x208] sm:$0xff]
        %v433 = vld [vmem:[#allocation9 + $0x210] sm:$0xff]
        %v434 = vld [vmem:[#allocation9 + $0x218] sm:$0xff]
        %v435 = vld [vmem:[#allocation9 + $0x220] sm:$0xff]
        %v436 = vld [vmem:[#allocation9 + $0x228] sm:$0xff]
        %v437 = vld [vmem:[#allocation9 + $0x230] sm:$0xff]
        %v438 = vld [vmem:[#allocation9 + $0x238] sm:$0xff]
        %v439 = vld [vmem:[#allocation9 + $0x240] sm:$0xff]
        %v440 = vld [vmem:[#allocation9 + $0x248] sm:$0xff]
        %v441 = vld [vmem:[#allocation9 + $0x250] sm:$0xff]
        %v442 = vld [vmem:[#allocation9 + $0x258] sm:$0xff]
        %v443 = vld [vmem:[#allocation9 + $0x260] sm:$0xff]
        %v444 = vld [vmem:[#allocation9 + $0x268] sm:$0xff]
        %v445 = vld [vmem:[#allocation9 + $0x270] sm:$0xff]
        %v446 = vld [vmem:[#allocation9 + $0x278] sm:$0xff]
        %v447 = vld [vmem:[#allocation9 + $0x280] sm:$0xff]
        %v448 = vld [vmem:[#allocation9 + $0x288] sm:$0xff]
        %v449 = vld [vmem:[#allocation9 + $0x290] sm:$0xff]
        %v450 = vld [vmem:[#allocation9 + $0x298] sm:$0xff]
        %v451 = vld [vmem:[#allocation9 + $0x2a0] sm:$0xff]
        %v452 = vld [vmem:[#allocation9 + $0x2a8] sm:$0xff]
        %v453 = vld [vmem:[#allocation9 + $0x2b0] sm:$0xff]
        %v454 = vld [vmem:[#allocation9 + $0x2b8] sm:$0xff]
        %v455 = vld [vmem:[#allocation9 + $0x2c0] sm:$0xff]
        %v456 = vld [vmem:[#allocation9 + $0x2c8] sm:$0xff]
        %v457 = vld [vmem:[#allocation9 + $0x2d0] sm:$0xff]
        %v458 = vld [vmem:[#allocation9 + $0x2d8] sm:$0xff]
        %v459 = vld [vmem:[#allocation9 + $0x2e0] sm:$0xff]
        %v460 = vld [vmem:[#allocation9 + $0x2e8] sm:$0xff]
        %v461 = vld [vmem:[#allocation9 + $0x2f0] sm:$0xff]
        %v462 = vld [vmem:[#allocation9 + $0x2f8] sm:$0xff]
        %v463 = vld [vmem:[#allocation9 + $0x300] sm:$0xff]
        %v464 = vld [vmem:[#allocation9 + $0x308] sm:$0xff]
        %v465 = vld [vmem:[#allocation9 + $0x310] sm:$0xff]
        %v466 = vld [vmem:[#allocation9 + $0x318] sm:$0xff]
        %v467 = vld [vmem:[#allocation9 + $0x320] sm:$0xff]
        %v468 = vld [vmem:[#allocation9 + $0x328] sm:$0xff]
        %v469 = vld [vmem:[#allocation9 + $0x330] sm:$0xff]
        %v470 = vld [vmem:[#allocation9 + $0x338] sm:$0xff]
        %v471 = vld [vmem:[#allocation9 + $0x340] sm:$0xff]
        %v472 = vld [vmem:[#allocation9 + $0x348] sm:$0xff]
        %v473 = vld [vmem:[#allocation9 + $0x350] sm:$0xff]
        %v474 = vld [vmem:[#allocation9 + $0x358] sm:$0xff]
        %v475 = vld [vmem:[#allocation9 + $0x360] sm:$0xff]
        %v476 = vld [vmem:[#allocation9 + $0x368] sm:$0xff]
        %v477 = vld [vmem:[#allocation9 + $0x370] sm:$0xff]
        %v478 = vld [vmem:[#allocation9 + $0x378] sm:$0xff]
        %v479 = vld [vmem:[#allocation9 + $0x380] sm:$0xff]
        %v480 = vld [vmem:[#allocation9 + $0x388] sm:$0xff]
        %v481 = vld [vmem:[#allocation9 + $0x390] sm:$0xff]
        %v482 = vld [vmem:[#allocation9 + $0x398] sm:$0xff]
        %v483 = vld [vmem:[#allocation9 + $0x3a0] sm:$0xff]
        %v484 = vld [vmem:[#allocation9 + $0x3a8] sm:$0xff]
        %v485 = vld [vmem:[#allocation9 + $0x3b0] sm:$0xff]
        %v486 = vld [vmem:[#allocation9 + $0x3b8] sm:$0xff]
        %v487 = vld [vmem:[#allocation9 + $0x3c0] sm:$0xff]
        %v488 = vld [vmem:[#allocation9 + $0x3c8] sm:$0xff]
        %v489 = vld [vmem:[#allocation9 + $0x3d0] sm:$0xff]
        %v490 = vld [vmem:[#allocation9 + $0x3d8] sm:$0xff]
        %v491 = vld [vmem:[#allocation9 + $0x3e0] sm:$0xff]
        %v492 = vld [vmem:[#allocation9 + $0x3e8] sm:$0xff]
        %v493 = vld [vmem:[#allocation9 + $0x3f0] sm:$0xff]
        %v494 = vld [vmem:[#allocation9 + $0x3f8] sm:$0xff]
        %v495 = vld [vmem:[#allocation9 + $0x400] sm:$0xff]
        %v496 = vld [vmem:[#allocation9 + $0x408] sm:$0xff]
        %v497 = vld [vmem:[#allocation9 + $0x410] sm:$0xff]
        %v498 = vld [vmem:[#allocation9 + $0x418] sm:$0xff]
        %v499 = vld [vmem:[#allocation9 + $0x420] sm:$0xff]
        %v500 = vld [vmem:[#allocation9 + $0x428] sm:$0xff]
        %v501 = vld [vmem:[#allocation9 + $0x430] sm:$0xff]
        %v502 = vld [vmem:[#allocation9 + $0x438] sm:$0xff]
        %v503 = vld [vmem:[#allocation9 + $0x440] sm:$0xff]
        %v504 = vld [vmem:[#allocation9 + $0x448] sm:$0xff]
        %v505 = vld [vmem:[#allocation9 + $0x450] sm:$0xff]
        %v506 = vld [vmem:[#allocation9 + $0x458] sm:$0xff]
        %v507 = vld [vmem:[#allocation9 + $0x460] sm:$0xff]
        %v508 = vld [vmem:[#allocation9 + $0x468] sm:$0xff]
        %v509 = vld [vmem:[#allocation9 + $0x470] sm:$0xff]
        %v510 = vld [vmem:[#allocation9 + $0x478] sm:$0xff]
        %v511 = vld [vmem:[#allocation9 + $0x480] sm:$0xff]
        %v512 = vld [vmem:[#allocation9 + $0x488] sm:$0xff]
        %v513 = vld [vmem:[#allocation9 + $0x490] sm:$0xff]
        %v514 = vld [vmem:[#allocation9 + $0x498] sm:$0xff]
        %v515 = vld [vmem:[#allocation9 + $0x4a0] sm:$0xff]
        %v516 = vld [vmem:[#allocation9 + $0x4a8] sm:$0xff]
        %v517 = vld [vmem:[#allocation9 + $0x4b0] sm:$0xff]
        %v518 = vld [vmem:[#allocation9 + $0x4b8] sm:$0xff]
        %v519 = vld [vmem:[#allocation9 + $0x4c0] sm:$0xff]
        %v520 = vld [vmem:[#allocation9 + $0x4c8] sm:$0xff]
        %v521 = vld [vmem:[#allocation9 + $0x4d0] sm:$0xff]
        %v522 = vld [vmem:[#allocation9 + $0x4d8] sm:$0xff]
        %v523 = vld [vmem:[#allocation9 + $0x4e0] sm:$0xff]
        %v524 = vld [vmem:[#allocation9 + $0x4e8] sm:$0xff]
        %v525 = vld [vmem:[#allocation9 + $0x4f0] sm:$0xff]
        %v526 = vld [vmem:[#allocation9 + $0x4f8] sm:$0xff]
        %v527 = vld [vmem:[#allocation9 + $0x500] sm:$0xff]
        %v528 = vld [vmem:[#allocation9 + $0x508] sm:$0xff]
        %v529 = vld [vmem:[#allocation9 + $0x510] sm:$0xff]
        %v530 = vld [vmem:[#allocation9 + $0x518] sm:$0xff]
        %v531 = vld [vmem:[#allocation9 + $0x520] sm:$0xff]
        %v532 = vld [vmem:[#allocation9 + $0x528] sm:$0xff]
        %v533 = vld [vmem:[#allocation9 + $0x530] sm:$0xff]
        %v534 = vld [vmem:[#allocation9 + $0x538] sm:$0xff]
        %v535 = vld [vmem:[#allocation9 + $0x540] sm:$0xff]
        %v536 = vld [vmem:[#allocation9 + $0x548] sm:$0xff]
        %v537 = vld [vmem:[#allocation9 + $0x550] sm:$0xff]
        %v538 = vld [vmem:[#allocation9 + $0x558] sm:$0xff]
        %v539 = vld [vmem:[#allocation9 + $0x560] sm:$0xff]
        %v540 = vld [vmem:[#allocation9 + $0x568] sm:$0xff]
        %v541 = vld [vmem:[#allocation9 + $0x570] sm:$0xff]
        %v542 = vld [vmem:[#allocation9 + $0x578] sm:$0xff]
        %v543 = vld [vmem:[#allocation9 + $0x580] sm:$0xff]
        %v544 = vld [vmem:[#allocation9 + $0x588] sm:$0xff]
        %v545 = vld [vmem:[#allocation9 + $0x590] sm:$0xff]
        %v546 = vld [vmem:[#allocation9 + $0x598] sm:$0xff]
        %v547 = vld [vmem:[#allocation9 + $0x5a0] sm:$0xff]
        %v548 = vld [vmem:[#allocation9 + $0x5a8] sm:$0xff]
        %v549 = vld [vmem:[#allocation9 + $0x5b0] sm:$0xff]
        %v550 = vld [vmem:[#allocation9 + $0x5b8] sm:$0xff]
        %v551 = vld [vmem:[#allocation9 + $0x5c0] sm:$0xff]
        %v552 = vld [vmem:[#allocation9 + $0x5c8] sm:$0xff]
        %v553 = vld [vmem:[#allocation9 + $0x5d0] sm:$0xff]
        %v554 = vld [vmem:[#allocation9 + $0x5d8] sm:$0xff]
        %v555 = vld [vmem:[#allocation9 + $0x5e0] sm:$0xff]
        %v556 = vld [vmem:[#allocation9 + $0x5e8] sm:$0xff]
        %v557 = vld [vmem:[#allocation9 + $0x5f0] sm:$0xff]
        %v558 = vld [vmem:[#allocation9 + $0x5f8] sm:$0xff]
        %v559 = vld [vmem:[#allocation9 + $0x600] sm:$0xff]
        %v560 = vld [vmem:[#allocation9 + $0x608] sm:$0xff]
        %v561 = vld [vmem:[#allocation9 + $0x610] sm:$0xff]
        %v562 = vld [vmem:[#allocation9 + $0x618] sm:$0xff]
        %v563 = vld [vmem:[#allocation9 + $0x620] sm:$0xff]
        %v564 = vld [vmem:[#allocation9 + $0x628] sm:$0xff]
        %v565 = vld [vmem:[#allocation9 + $0x630] sm:$0xff]
        %v566 = vld [vmem:[#allocation9 + $0x638] sm:$0xff]
        %v567 = vld [vmem:[#allocation9 + $0x640] sm:$0xff]
        %v568 = vld [vmem:[#allocation9 + $0x648] sm:$0xff]
        %v569 = vld [vmem:[#allocation9 + $0x650] sm:$0xff]
        %v570 = vld [vmem:[#allocation9 + $0x658] sm:$0xff]
        %v571 = vld [vmem:[#allocation9 + $0x660] sm:$0xff]
        %v572 = vld [vmem:[#allocation9 + $0x668] sm:$0xff]
        %v573 = vld [vmem:[#allocation9 + $0x670] sm:$0xff]
        %v574 = vld [vmem:[#allocation9 + $0x678] sm:$0xff]
        %v575 = vld [vmem:[#allocation9 + $0x680] sm:$0xff]
        %v576 = vld [vmem:[#allocation9 + $0x688] sm:$0xff]
        %v577 = vld [vmem:[#allocation9 + $0x690] sm:$0xff]
        %v578 = vld [vmem:[#allocation9 + $0x698] sm:$0xff]
        %v579 = vld [vmem:[#allocation9 + $0x6a0] sm:$0xff]
        %v580 = vld [vmem:[#allocation9 + $0x6a8] sm:$0xff]
        %v581 = vld [vmem:[#allocation9 + $0x6b0] sm:$0xff]
        %v582 = vld [vmem:[#allocation9 + $0x6b8] sm:$0xff]
        %v583 = vld [vmem:[#allocation9 + $0x6c0] sm:$0xff]
        %v584 = vld [vmem:[#allocation9 + $0x6c8] sm:$0xff]
        %v585 = vld [vmem:[#allocation9 + $0x6d0] sm:$0xff]
        %v586 = vld [vmem:[#allocation9 + $0x6d8] sm:$0xff]
        %v587 = vld [vmem:[#allocation9 + $0x6e0] sm:$0xff]
        %v588 = vld [vmem:[#allocation9 + $0x6e8] sm:$0xff]
        %v589 = vld [vmem:[#allocation9 + $0x6f0] sm:$0xff]
        %v590 = vld [vmem:[#allocation9 + $0x6f8] sm:$0xff]
        %v591 = vld [vmem:[#allocation9 + $0x700] sm:$0xff]
        %v592 = vld [vmem:[#allocation9 + $0x708] sm:$0xff]
        %v593 = vld [vmem:[#allocation9 + $0x710] sm:$0xff]
        %v594 = vld [vmem:[#allocation9 + $0x718] sm:$0xff]
        %v595 = vld [vmem:[#allocation9 + $0x720] sm:$0xff]
        %v596 = vld [vmem:[#allocation9 + $0x728] sm:$0xff]
        %v597 = vld [vmem:[#allocation9 + $0x730] sm:$0xff]
        %v598 = vld [vmem:[#allocation9 + $0x738] sm:$0xff]
        %v599 = vld [vmem:[#allocation9 + $0x740] sm:$0xff]
        %v600 = vld [vmem:[#allocation9 + $0x748] sm:$0xff]
        %v601 = vld [vmem:[#allocation9 + $0x750] sm:$0xff]
        %v602 = vld [vmem:[#allocation9 + $0x758] sm:$0xff]
        %v603 = vld [vmem:[#allocation9 + $0x760] sm:$0xff]
        %v604 = vld [vmem:[#allocation9 + $0x768] sm:$0xff]
        %v605 = vld [vmem:[#allocation9 + $0x770] sm:$0xff]
        %v606 = vld [vmem:[#allocation9 + $0x778] sm:$0xff]
        %v607 = vld [vmem:[#allocation9 + $0x780] sm:$0xff]
        %v608 = vld [vmem:[#allocation9 + $0x788] sm:$0xff]
        %v609 = vld [vmem:[#allocation9 + $0x790] sm:$0xff]
        %v610 = vld [vmem:[#allocation9 + $0x798] sm:$0xff]
        %v611 = vld [vmem:[#allocation9 + $0x7a0] sm:$0xff]
        %v612 = vld [vmem:[#allocation9 + $0x7a8] sm:$0xff]
        %v613 = vld [vmem:[#allocation9 + $0x7b0] sm:$0xff]
        %v614 = vld [vmem:[#allocation9 + $0x7b8] sm:$0xff]
        %v615 = vld [vmem:[#allocation9 + $0x7c0] sm:$0xff]
        %v616 = vld [vmem:[#allocation9 + $0x7c8] sm:$0xff]
        %v617 = vld [vmem:[#allocation9 + $0x7d0] sm:$0xff]
        %v618 = vld [vmem:[#allocation9 + $0x7d8] sm:$0xff]
        %v619 = vld [vmem:[#allocation9 + $0x7e0] sm:$0xff]
        %v620 = vld [vmem:[#allocation9 + $0x7e8] sm:$0xff]
        %v621 = vld [vmem:[#allocation9 + $0x7f0] sm:$0xff]
        %v622 = vld [vmem:[#allocation9 + $0x7f8] sm:$0xff]
        %v625 = vunpack.c.l.s4 1983009808
        %v626 = vunpack.c.0.s8 %v625
        %v627 = vlaneseq
        %v628 = vshrl.u32 %v627, 7
        %v629 = vsub.s32 %v626, %v628
        %v630 = vrot.slane %v366, %v629
        %v631 = vcombine.high %v630, %v630
        %634 = vmatprep.subr.mxu0 %v488
        %635 = vmatpush1.msra.mxu0 %v487
        %636 = vmatprep.subr.mxu0 %v480
        %637 = vmatpush1.msra.mxu0 %v479
        %638 = vmatprep.subr.mxu0 %v472
        %639 = vmatpush1.msra.mxu0 %v471
        %640 = vmatprep.subr.mxu0 %v464
        %641 = vmatpush1.msra.mxu0 %v463
        %642 = vmatprep.subr.mxu0 %v456
        %643 = vmatpush1.msra.mxu0 %v455
        %644 = vmatprep.subr.mxu0 %v448
        %645 = vmatpush1.msra.mxu0 %v447
        %646 = vmatprep.subr.mxu0 %v440
        %647 = vmatpush1.msra.mxu0 %v439
        %648 = vmatprep.subr.mxu0 %v432
        %649 = vmatpush1.msra.mxu0 %v431
        %650 = vmatprep.subr.mxu0 %v424
        %651 = vmatpush1.msra.mxu0 %v423
        %652 = vmatprep.subr.mxu0 %v416
        %653 = vmatpush1.msra.mxu0 %v415
        %654 = vmatprep.subr.mxu0 %v408
        %655 = vmatpush1.msra.mxu0 %v407
        %656 = vmatprep.subr.mxu0 %v400
        %657 = vmatpush1.msra.mxu0 %v399
        %658 = vmatprep.subr.mxu0 %v392
        %659 = vmatpush1.msra.mxu0 %v391
        %660 = vmatprep.subr.mxu0 %v384
        %661 = vmatpush1.msra.mxu0 %v383
        %662 = vmatprep.subr.mxu0 %v376
        %663 = vmatpush1.msra.mxu0 %v375
        %664 = vmatprep.subr.mxu0 %v368
        %665 = vmatpush1.msra.mxu0 %v367
        %666 = vmatprep.subr.mxu0 %v616
        %667 = vmatpush2.msra.mxu0 %v615
        %668 = vmatprep.subr.mxu0 %v608
        %669 = vmatpush2.msra.mxu0 %v607
        %670 = vmatprep.subr.mxu0 %v600
        %671 = vmatpush2.msra.mxu0 %v599
        %672 = vmatprep.subr.mxu0 %v592
        %673 = vmatpush2.msra.mxu0 %v591
        %674 = vmatprep.subr.mxu0 %v584
        %675 = vmatpush2.msra.mxu0 %v583
        %676 = vmatprep.subr.mxu0 %v576
        %677 = vmatpush2.msra.mxu0 %v575
        %678 = vmatprep.subr.mxu0 %v568
        %679 = vmatpush2.msra.mxu0 %v567
        %680 = vmatprep.subr.mxu0 %v560
        %681 = vmatpush2.msra.mxu0 %v559
        %682 = vmatprep.subr.mxu0 %v552
        %683 = vmatpush2.msra.mxu0 %v551
        %684 = vmatprep.subr.mxu0 %v544
        %685 = vmatpush2.msra.mxu0 %v543
        %686 = vmatprep.subr.mxu0 %v536
        %687 = vmatpush2.msra.mxu0 %v535
        %688 = vmatprep.subr.mxu0 %v528
        %689 = vmatpush2.msra.mxu0 %v527
        %690 = vmatprep.subr.mxu0 %v520
        %691 = vmatpush2.msra.mxu0 %v519
        %692 = vmatprep.subr.mxu0 %v512
        %693 = vmatpush2.msra.mxu0 %v511
        %694 = vmatprep.subr.mxu0 %v504
        %695 = vmatpush2.msra.mxu0 %v503
        %696 = vmatprep.subr.mxu0 %v496
        %697 = vmatpush2.msra.mxu0 %v495
        %698 = vmatprep.mubr.f32.mxu0 %v631
        %699 = vmatmul.mubr.f32.gmra.mxu0 %v630
        %v700 = vpop.f32.mrf.mxu0
        %v701 = vadd.f32 0.0, %v700
        %v702 = vpop.f32.mrf.mxu0
        %v703 = vadd.f32 0.0, %v702
        %704 = vdwg.mxu0
        %705 = vmatprep.subr.mxu0 %v490
        %706 = vmatpush1.msra.mxu0 %v489
        %707 = vmatprep.subr.mxu0 %v482
        %708 = vmatpush1.msra.mxu0 %v481
        %709 = vmatprep.subr.mxu0 %v474
        %710 = vmatpush1.msra.mxu0 %v473
        %711 = vmatprep.subr.mxu0 %v466
        %712 = vmatpush1.msra.mxu0 %v465
        %713 = vmatprep.subr.mxu0 %v458
        %714 = vmatpush1.msra.mxu0 %v457
        %715 = vmatprep.subr.mxu0 %v450
        %716 = vmatpush1.msra.mxu0 %v449
        %717 = vmatprep.subr.mxu0 %v442
        %718 = vmatpush1.msra.mxu0 %v441
        %719 = vmatprep.subr.mxu0 %v434
        %720 = vmatpush1.msra.mxu0 %v433
        %721 = vmatprep.subr.mxu0 %v426
        %722 = vmatpush1.msra.mxu0 %v425
        %723 = vmatprep.subr.mxu0 %v418
        %724 = vmatpush1.msra.mxu0 %v417
        %725 = vmatprep.subr.mxu0 %v410
        %726 = vmatpush1.msra.mxu0 %v409
        %727 = vmatprep.subr.mxu0 %v402
        %728 = vmatpush1.msra.mxu0 %v401
        %729 = vmatprep.subr.mxu0 %v394
        %730 = vmatpush1.msra.mxu0 %v393
        %731 = vmatprep.subr.mxu0 %v386
        %732 = vmatpush1.msra.mxu0 %v385
        %733 = vmatprep.subr.mxu0 %v378
        %734 = vmatpush1.msra.mxu0 %v377
        %735 = vmatprep.subr.mxu0 %v370
        %736 = vmatpush1.msra.mxu0 %v369
        %737 = vmatprep.subr.mxu0 %v618
        %738 = vmatpush2.msra.mxu0 %v617
        %739 = vmatprep.subr.mxu0 %v610
        %740 = vmatpush2.msra.mxu0 %v609
        %741 = vmatprep.subr.mxu0 %v602
        %742 = vmatpush2.msra.mxu0 %v601
        %743 = vmatprep.subr.mxu0 %v594
        %744 = vmatpush2.msra.mxu0 %v593
        %745 = vmatprep.subr.mxu0 %v586
        %746 = vmatpush2.msra.mxu0 %v585
        %747 = vmatprep.subr.mxu0 %v578
        %748 = vmatpush2.msra.mxu0 %v577
        %749 = vmatprep.subr.mxu0 %v570
        %750 = vmatpush2.msra.mxu0 %v569
        %751 = vmatprep.subr.mxu0 %v562
        %752 = vmatpush2.msra.mxu0 %v561
        %753 = vmatprep.subr.mxu0 %v554
        %754 = vmatpush2.msra.mxu0 %v553
        %755 = vmatprep.subr.mxu0 %v546
        %756 = vmatpush2.msra.mxu0 %v545
        %757 = vmatprep.subr.mxu0 %v538
        %758 = vmatpush2.msra.mxu0 %v537
        %759 = vmatprep.subr.mxu0 %v530
        %760 = vmatpush2.msra.mxu0 %v529
        %761 = vmatprep.subr.mxu0 %v522
        %762 = vmatpush2.msra.mxu0 %v521
        %763 = vmatprep.subr.mxu0 %v514
        %764 = vmatpush2.msra.mxu0 %v513
        %765 = vmatprep.subr.mxu0 %v506
        %766 = vmatpush2.msra.mxu0 %v505
        %767 = vmatprep.subr.mxu0 %v498
        %768 = vmatpush2.msra.mxu0 %v497
        %769 = vmatprep.mubr.f32.mxu0 %v631
        %770 = vmatmul.mubr.f32.gmra.mxu0 %v630
        %v771 = vpop.f32.mrf.mxu0
        %v772 = vadd.f32 0.0, %v771
        %v773 = vpop.f32.mrf.mxu0
        %v774 = vadd.f32 0.0, %v773
        %775 = vdwg.mxu0
        %776 = vmatprep.subr.mxu0 %v492
        %777 = vmatpush1.msra.mxu0 %v491
        %778 = vmatprep.subr.mxu0 %v484
        %779 = vmatpush1.msra.mxu0 %v483
        %780 = vmatprep.subr.mxu0 %v476
        %781 = vmatpush1.msra.mxu0 %v475
        %782 = vmatprep.subr.mxu0 %v468
        %783 = vmatpush1.msra.mxu0 %v467
        %784 = vmatprep.subr.mxu0 %v460
        %785 = vmatpush1.msra.mxu0 %v459
        %786 = vmatprep.subr.mxu0 %v452
        %787 = vmatpush1.msra.mxu0 %v451
        %788 = vmatprep.subr.mxu0 %v444
        %789 = vmatpush1.msra.mxu0 %v443
        %790 = vmatprep.subr.mxu0 %v436
        %791 = vmatpush1.msra.mxu0 %v435
        %792 = vmatprep.subr.mxu0 %v428
        %793 = vmatpush1.msra.mxu0 %v427
        %794 = vmatprep.subr.mxu0 %v420
        %795 = vmatpush1.msra.mxu0 %v419
        %796 = vmatprep.subr.mxu0 %v412
        %797 = vmatpush1.msra.mxu0 %v411
        %798 = vmatprep.subr.mxu0 %v404
        %799 = vmatpush1.msra.mxu0 %v403
        %800 = vmatprep.subr.mxu0 %v396
        %801 = vmatpush1.msra.mxu0 %v395
        %802 = vmatprep.subr.mxu0 %v388
        %803 = vmatpush1.msra.mxu0 %v387
        %804 = vmatprep.subr.mxu0 %v380
        %805 = vmatpush1.msra.mxu0 %v379
        %806 = vmatprep.subr.mxu0 %v372
        %807 = vmatpush1.msra.mxu0 %v371
        %808 = vmatprep.subr.mxu0 %v620
        %809 = vmatpush2.msra.mxu0 %v619
        %810 = vmatprep.subr.mxu0 %v612
        %811 = vmatpush2.msra.mxu0 %v611
        %812 = vmatprep.subr.mxu0 %v604
        %813 = vmatpush2.msra.mxu0 %v603
        %814 = vmatprep.subr.mxu0 %v596
        %815 = vmatpush2.msra.mxu0 %v595
        %816 = vmatprep.subr.mxu0 %v588
        %817 = vmatpush2.msra.mxu0 %v587
        %818 = vmatprep.subr.mxu0 %v580
        %819 = vmatpush2.msra.mxu0 %v579
        %820 = vmatprep.subr.mxu0 %v572
        %821 = vmatpush2.msra.mxu0 %v571
        %822 = vmatprep.subr.mxu0 %v564
        %823 = vmatpush2.msra.mxu0 %v563
        %824 = vmatprep.subr.mxu0 %v556
        %825 = vmatpush2.msra.mxu0 %v555
        %826 = vmatprep.subr.mxu0 %v548
        %827 = vmatpush2.msra.mxu0 %v547
        %828 = vmatprep.subr.mxu0 %v540
        %829 = vmatpush2.msra.mxu0 %v539
        %830 = vmatprep.subr.mxu0 %v532
        %831 = vmatpush2.msra.mxu0 %v531
        %832 = vmatprep.subr.mxu0 %v524
        %833 = vmatpush2.msra.mxu0 %v523
        %834 = vmatprep.subr.mxu0 %v516
        %835 = vmatpush2.msra.mxu0 %v515
        %836 = vmatprep.subr.mxu0 %v508
        %837 = vmatpush2.msra.mxu0 %v507
        %838 = vmatprep.subr.mxu0 %v500
        %839 = vmatpush2.msra.mxu0 %v499
        %840 = vmatprep.mubr.f32.mxu0 %v631
        %841 = vmatmul.mubr.f32.gmra.mxu0 %v630
        %v842 = vpop.f32.mrf.mxu0
        %v843 = vadd.f32 0.0, %v842
        %v844 = vpop.f32.mrf.mxu0
        %v845 = vadd.f32 0.0, %v844
        %846 = vdwg.mxu0
        %847 = vmatprep.subr.mxu0 %v494
        %848 = vmatpush1.msra.mxu0 %v493
        %849 = vmatprep.subr.mxu0 %v486
        %850 = vmatpush1.msra.mxu0 %v485
        %851 = vmatprep.subr.mxu0 %v478
        %852 = vmatpush1.msra.mxu0 %v477
        %853 = vmatprep.subr.mxu0 %v470
        %854 = vmatpush1.msra.mxu0 %v469
        %855 = vmatprep.subr.mxu0 %v462
        %856 = vmatpush1.msra.mxu0 %v461
        %857 = vmatprep.subr.mxu0 %v454
        %858 = vmatpush1.msra.mxu0 %v453
        %859 = vmatprep.subr.mxu0 %v446
        %860 = vmatpush1.msra.mxu0 %v445
        %861 = vmatprep.subr.mxu0 %v438
        %862 = vmatpush1.msra.mxu0 %v437
        %863 = vmatprep.subr.mxu0 %v430
        %864 = vmatpush1.msra.mxu0 %v429
        %865 = vmatprep.subr.mxu0 %v422
        %866 = vmatpush1.msra.mxu0 %v421
        %867 = vmatprep.subr.mxu0 %v414
        %868 = vmatpush1.msra.mxu0 %v413
        %869 = vmatprep.subr.mxu0 %v406
        %870 = vmatpush1.msra.mxu0 %v405
        %871 = vmatprep.subr.mxu0 %v398
        %872 = vmatpush1.msra.mxu0 %v397
        %873 = vmatprep.subr.mxu0 %v390
        %874 = vmatpush1.msra.mxu0 %v389
        %875 = vmatprep.subr.mxu0 %v382
        %876 = vmatpush1.msra.mxu0 %v381
        %877 = vmatprep.subr.mxu0 %v374
        %878 = vmatpush1.msra.mxu0 %v373
        %879 = vmatprep.subr.mxu0 %v622
        %880 = vmatpush2.msra.mxu0 %v621
        %881 = vmatprep.subr.mxu0 %v614
        %882 = vmatpush2.msra.mxu0 %v613
        %883 = vmatprep.subr.mxu0 %v606
        %884 = vmatpush2.msra.mxu0 %v605
        %885 = vmatprep.subr.mxu0 %v598
        %886 = vmatpush2.msra.mxu0 %v597
        %887 = vmatprep.subr.mxu0 %v590
        %888 = vmatpush2.msra.mxu0 %v589
        %889 = vmatprep.subr.mxu0 %v582
        %890 = vmatpush2.msra.mxu0 %v581
        %891 = vmatprep.subr.mxu0 %v574
        %892 = vmatpush2.msra.mxu0 %v573
        %893 = vmatprep.subr.mxu0 %v566
        %894 = vmatpush2.msra.mxu0 %v565
        %895 = vmatprep.subr.mxu0 %v558
        %896 = vmatpush2.msra.mxu0 %v557
        %897 = vmatprep.subr.mxu0 %v550
        %898 = vmatpush2.msra.mxu0 %v549
        %899 = vmatprep.subr.mxu0 %v542
        %900 = vmatpush2.msra.mxu0 %v541
        %901 = vmatprep.subr.mxu0 %v534
        %902 = vmatpush2.msra.mxu0 %v533
        %903 = vmatprep.subr.mxu0 %v526
        %904 = vmatpush2.msra.mxu0 %v525
        %905 = vmatprep.subr.mxu0 %v518
        %906 = vmatpush2.msra.mxu0 %v517
        %907 = vmatprep.subr.mxu0 %v510
        %908 = vmatpush2.msra.mxu0 %v509
        %909 = vmatprep.subr.mxu0 %v502
        %910 = vmatpush2.msra.mxu0 %v501
        %911 = vmatprep.mubr.f32.mxu0 %v631
        %912 = vmatmul.mubr.f32.gmra.mxu0 %v630
        %v913 = vpop.f32.mrf.mxu0
        %v914 = vadd.f32 0.0, %v913
        %v915 = vpop.f32.mrf.mxu0
        %v916 = vadd.f32 0.0, %v915
        %917 = vdwg.mxu0
        %vm918 = vcmask 818176
        %v920 = vsel %vm918, %v261, 0
        %vm922 = vcmask 1043456
        %v924 = vsel %vm922, %v358, 0
        %v927 = vsel %vm922, %v359, 0
        %v930 = vsel %vm922, %v360, 0
        %v933 = vsel %vm922, %v361, 0
        %v936 = vsel %vm922, %v362, 0
        %v939 = vsel %vm922, %v363, 0
        %v942 = vsel %vm922, %v364, 0
        %v945 = vsel %vm922, %v365, 0
        %947 = vmatprep.subr.mxu0 0.0
        %948 = vmatpush1.msra.mxu0 0.0
        %949 = vmatprep.subr.mxu0 0.0
        %950 = vmatpush1.msra.mxu0 0.0
        %951 = vmatprep.subr.mxu0 0.0
        %952 = vmatpush1.msra.mxu0 0.0
        %953 = vmatprep.subr.mxu0 %v927
        %954 = vmatpush1.msra.mxu0 %v924
        %955 = vmatprep.subr.mxu0 %v351
        %956 = vmatpush1.msra.mxu0 %v350
        %957 = vmatprep.subr.mxu0 %v343
        %958 = vmatpush1.msra.mxu0 %v342
        %959 = vmatprep.subr.mxu0 %v335
        %960 = vmatpush1.msra.mxu0 %v334
        %961 = vmatprep.subr.mxu0 %v327
        %962 = vmatpush1.msra.mxu0 %v326
        %963 = vmatprep.subr.mxu0 %v319
        %964 = vmatpush1.msra.mxu0 %v318
        %965 = vmatprep.subr.mxu0 %v311
        %966 = vmatpush1.msra.mxu0 %v310
        %967 = vmatprep.subr.mxu0 %v303
        %968 = vmatpush1.msra.mxu0 %v302
        %969 = vmatprep.subr.mxu0 %v295
        %970 = vmatpush1.msra.mxu0 %v294
        %971 = vmatprep.subr.mxu0 %v287
        %972 = vmatpush1.msra.mxu0 %v286
        %973 = vmatprep.subr.mxu0 %v279
        %974 = vmatpush1.msra.mxu0 %v278
        %975 = vmatprep.subr.mxu0 %v271
        %976 = vmatpush1.msra.mxu0 %v270
        %977 = vmatprep.subr.mxu0 %v263
        %978 = vmatpush1.msra.mxu0 %v262
        %979 = vmatprep.subr.mxu0 0.0
        %980 = vmatpush2.msra.mxu0 0.0
        %981 = vmatprep.subr.mxu0 0.0
        %982 = vmatpush2.msra.mxu0 0.0
        %983 = vmatprep.subr.mxu0 0.0
        %984 = vmatpush2.msra.mxu0 0.0
        %985 = vmatprep.subr.mxu0 0.0
        %986 = vmatpush2.msra.mxu0 0.0
        %987 = vmatprep.subr.mxu0 0.0
        %988 = vmatpush2.msra.mxu0 0.0
        %989 = vmatprep.subr.mxu0 0.0
        %990 = vmatpush2.msra.mxu0 0.0
        %991 = vmatprep.subr.mxu0 0.0
        %992 = vmatpush2.msra.mxu0 0.0
        %993 = vmatprep.subr.mxu0 0.0
        %994 = vmatpush2.msra.mxu0 0.0
        %995 = vmatprep.subr.mxu0 0.0
        %996 = vmatpush2.msra.mxu0 0.0
        %997 = vmatprep.subr.mxu0 0.0
        %998 = vmatpush2.msra.mxu0 0.0
        %999 = vmatprep.subr.mxu0 0.0
        %1000 = vmatpush2.msra.mxu0 0.0
        %1001 = vmatprep.subr.mxu0 0.0
        %1002 = vmatpush2.msra.mxu0 0.0
        %1003 = vmatprep.subr.mxu0 0.0
        %1004 = vmatpush2.msra.mxu0 0.0
        %1005 = vmatprep.subr.mxu0 0.0
        %1006 = vmatpush2.msra.mxu0 0.0
        %1007 = vmatprep.subr.mxu0 0.0
        %1008 = vmatpush2.msra.mxu0 0.0
        %1009 = vmatprep.subr.mxu0 0.0
        %1010 = vmatpush2.msra.mxu0 0.0
        %1011 = vmatprep.mubr.f32.mxu0 0.0
        %1012 = vmatmul.mubr.f32.gmra.mxu0 %v920
        %v1013 = vpop.f32.mrf.mxu0
        %v1014 = vadd.f32 %v701, %v1013
        %v1015 = vpop.f32.mrf.mxu0
        %v1016 = vadd.f32 %v703, %v1015
        %1017 = vdwg.mxu0
        %1018 = vmatprep.subr.mxu0 0.0
        %1019 = vmatpush1.msra.mxu0 0.0
        %1020 = vmatprep.subr.mxu0 0.0
        %1021 = vmatpush1.msra.mxu0 0.0
        %1022 = vmatprep.subr.mxu0 0.0
        %1023 = vmatpush1.msra.mxu0 0.0
        %1024 = vmatprep.subr.mxu0 %v933
        %1025 = vmatpush1.msra.mxu0 %v930
        %1026 = vmatprep.subr.mxu0 %v353
        %1027 = vmatpush1.msra.mxu0 %v352
        %1028 = vmatprep.subr.mxu0 %v345
        %1029 = vmatpush1.msra.mxu0 %v344
        %1030 = vmatprep.subr.mxu0 %v337
        %1031 = vmatpush1.msra.mxu0 %v336
        %1032 = vmatprep.subr.mxu0 %v329
        %1033 = vmatpush1.msra.mxu0 %v328
        %1034 = vmatprep.subr.mxu0 %v321
        %1035 = vmatpush1.msra.mxu0 %v320
        %1036 = vmatprep.subr.mxu0 %v313
        %1037 = vmatpush1.msra.mxu0 %v312
        %1038 = vmatprep.subr.mxu0 %v305
        %1039 = vmatpush1.msra.mxu0 %v304
        %1040 = vmatprep.subr.mxu0 %v297
        %1041 = vmatpush1.msra.mxu0 %v296
        %1042 = vmatprep.subr.mxu0 %v289
        %1043 = vmatpush1.msra.mxu0 %v288
        %1044 = vmatprep.subr.mxu0 %v281
        %1045 = vmatpush1.msra.mxu0 %v280
        %1046 = vmatprep.subr.mxu0 %v273
        %1047 = vmatpush1.msra.mxu0 %v272
        %1048 = vmatprep.subr.mxu0 %v265
        %1049 = vmatpush1.msra.mxu0 %v264
        %1050 = vmatprep.subr.mxu0 0.0
        %1051 = vmatpush2.msra.mxu0 0.0
        %1052 = vmatprep.subr.mxu0 0.0
        %1053 = vmatpush2.msra.mxu0 0.0
        %1054 = vmatprep.subr.mxu0 0.0
        %1055 = vmatpush2.msra.mxu0 0.0
        %1056 = vmatprep.subr.mxu0 0.0
        %1057 = vmatpush2.msra.mxu0 0.0
        %1058 = vmatprep.subr.mxu0 0.0
        %1059 = vmatpush2.msra.mxu0 0.0
        %1060 = vmatprep.subr.mxu0 0.0
        %1061 = vmatpush2.msra.mxu0 0.0
        %1062 = vmatprep.subr.mxu0 0.0
        %1063 = vmatpush2.msra.mxu0 0.0
        %1064 = vmatprep.subr.mxu0 0.0
        %1065 = vmatpush2.msra.mxu0 0.0
        %1066 = vmatprep.subr.mxu0 0.0
        %1067 = vmatpush2.msra.mxu0 0.0
        %1068 = vmatprep.subr.mxu0 0.0
        %1069 = vmatpush2.msra.mxu0 0.0
        %1070 = vmatprep.subr.mxu0 0.0
        %1071 = vmatpush2.msra.mxu0 0.0
        %1072 = vmatprep.subr.mxu0 0.0
        %1073 = vmatpush2.msra.mxu0 0.0
        %1074 = vmatprep.subr.mxu0 0.0
        %1075 = vmatpush2.msra.mxu0 0.0
        %1076 = vmatprep.subr.mxu0 0.0
        %1077 = vmatpush2.msra.mxu0 0.0
        %1078 = vmatprep.subr.mxu0 0.0
        %1079 = vmatpush2.msra.mxu0 0.0
        %1080 = vmatprep.subr.mxu0 0.0
        %1081 = vmatpush2.msra.mxu0 0.0
        %1082 = vmatprep.mubr.f32.mxu0 0.0
        %1083 = vmatmul.mubr.f32.gmra.mxu0 %v920
        %v1084 = vpop.f32.mrf.mxu0
        %v1085 = vadd.f32 %v772, %v1084
        %v1086 = vpop.f32.mrf.mxu0
        %v1087 = vadd.f32 %v774, %v1086
        %1088 = vdwg.mxu0
        %1089 = vmatprep.subr.mxu0 0.0
        %1090 = vmatpush1.msra.mxu0 0.0
        %1091 = vmatprep.subr.mxu0 0.0
        %1092 = vmatpush1.msra.mxu0 0.0
        %1093 = vmatprep.subr.mxu0 0.0
        %1094 = vmatpush1.msra.mxu0 0.0
        %1095 = vmatprep.subr.mxu0 %v939
        %1096 = vmatpush1.msra.mxu0 %v936
        %1097 = vmatprep.subr.mxu0 %v355
        %1098 = vmatpush1.msra.mxu0 %v354
        %1099 = vmatprep.subr.mxu0 %v347
        %1100 = vmatpush1.msra.mxu0 %v346
        %1101 = vmatprep.subr.mxu0 %v339
        %1102 = vmatpush1.msra.mxu0 %v338
        %1103 = vmatprep.subr.mxu0 %v331
        %1104 = vmatpush1.msra.mxu0 %v330
        %1105 = vmatprep.subr.mxu0 %v323
        %1106 = vmatpush1.msra.mxu0 %v322
        %1107 = vmatprep.subr.mxu0 %v315
        %1108 = vmatpush1.msra.mxu0 %v314
        %1109 = vmatprep.subr.mxu0 %v307
        %1110 = vmatpush1.msra.mxu0 %v306
        %1111 = vmatprep.subr.mxu0 %v299
        %1112 = vmatpush1.msra.mxu0 %v298
        %1113 = vmatprep.subr.mxu0 %v291
        %1114 = vmatpush1.msra.mxu0 %v290
        %1115 = vmatprep.subr.mxu0 %v283
        %1116 = vmatpush1.msra.mxu0 %v282
        %1117 = vmatprep.subr.mxu0 %v275
        %1118 = vmatpush1.msra.mxu0 %v274
        %1119 = vmatprep.subr.mxu0 %v267
        %1120 = vmatpush1.msra.mxu0 %v266
        %1121 = vmatprep.subr.mxu0 0.0
        %1122 = vmatpush2.msra.mxu0 0.0
        %1123 = vmatprep.subr.mxu0 0.0
        %1124 = vmatpush2.msra.mxu0 0.0
        %1125 = vmatprep.subr.mxu0 0.0
        %1126 = vmatpush2.msra.mxu0 0.0
        %1127 = vmatprep.subr.mxu0 0.0
        %1128 = vmatpush2.msra.mxu0 0.0
        %1129 = vmatprep.subr.mxu0 0.0
        %1130 = vmatpush2.msra.mxu0 0.0
        %1131 = vmatprep.subr.mxu0 0.0
        %1132 = vmatpush2.msra.mxu0 0.0
        %1133 = vmatprep.subr.mxu0 0.0
        %1134 = vmatpush2.msra.mxu0 0.0
        %1135 = vmatprep.subr.mxu0 0.0
        %1136 = vmatpush2.msra.mxu0 0.0
        %1137 = vmatprep.subr.mxu0 0.0
        %1138 = vmatpush2.msra.mxu0 0.0
        %1139 = vmatprep.subr.mxu0 0.0
        %1140 = vmatpush2.msra.mxu0 0.0
        %1141 = vmatprep.subr.mxu0 0.0
        %1142 = vmatpush2.msra.mxu0 0.0
        %1143 = vmatprep.subr.mxu0 0.0
        %1144 = vmatpush2.msra.mxu0 0.0
        %1145 = vmatprep.subr.mxu0 0.0
        %1146 = vmatpush2.msra.mxu0 0.0
        %1147 = vmatprep.subr.mxu0 0.0
        %1148 = vmatpush2.msra.mxu0 0.0
        %1149 = vmatprep.subr.mxu0 0.0
        %1150 = vmatpush2.msra.mxu0 0.0
        %1151 = vmatprep.subr.mxu0 0.0
        %1152 = vmatpush2.msra.mxu0 0.0
        %1153 = vmatprep.mubr.f32.mxu0 0.0
        %1154 = vmatmul.mubr.f32.gmra.mxu0 %v920
        %v1155 = vpop.f32.mrf.mxu0
        %v1156 = vadd.f32 %v843, %v1155
        %v1157 = vpop.f32.mrf.mxu0
        %v1158 = vadd.f32 %v845, %v1157
        %1159 = vdwg.mxu0
        %1160 = vmatprep.subr.mxu0 0.0
        %1161 = vmatpush1.msra.mxu0 0.0
        %1162 = vmatprep.subr.mxu0 0.0
        %1163 = vmatpush1.msra.mxu0 0.0
        %1164 = vmatprep.subr.mxu0 0.0
        %1165 = vmatpush1.msra.mxu0 0.0
        %1166 = vmatprep.subr.mxu0 %v945
        %1167 = vmatpush1.msra.mxu0 %v942
        %1168 = vmatprep.subr.mxu0 %v357
        %1169 = vmatpush1.msra.mxu0 %v356
        %1170 = vmatprep.subr.mxu0 %v349
        %1171 = vmatpush1.msra.mxu0 %v348
        %1172 = vmatprep.subr.mxu0 %v341
        %1173 = vmatpush1.msra.mxu0 %v340
        %1174 = vmatprep.subr.mxu0 %v333
        %1175 = vmatpush1.msra.mxu0 %v332
        %1176 = vmatprep.subr.mxu0 %v325
        %1177 = vmatpush1.msra.mxu0 %v324
        %1178 = vmatprep.subr.mxu0 %v317
        %1179 = vmatpush1.msra.mxu0 %v316
        %1180 = vmatprep.subr.mxu0 %v309
        %1181 = vmatpush1.msra.mxu0 %v308
        %1182 = vmatprep.subr.mxu0 %v301
        %1183 = vmatpush1.msra.mxu0 %v300
        %1184 = vmatprep.subr.mxu0 %v293
        %1185 = vmatpush1.msra.mxu0 %v292
        %1186 = vmatprep.subr.mxu0 %v285
        %1187 = vmatpush1.msra.mxu0 %v284
        %1188 = vmatprep.subr.mxu0 %v277
        %1189 = vmatpush1.msra.mxu0 %v276
        %1190 = vmatprep.subr.mxu0 %v269
        %1191 = vmatpush1.msra.mxu0 %v268
        %1192 = vmatprep.subr.mxu0 0.0
        %1193 = vmatpush2.msra.mxu0 0.0
        %1194 = vmatprep.subr.mxu0 0.0
        %1195 = vmatpush2.msra.mxu0 0.0
        %1196 = vmatprep.subr.mxu0 0.0
        %1197 = vmatpush2.msra.mxu0 0.0
        %1198 = vmatprep.subr.mxu0 0.0
        %1199 = vmatpush2.msra.mxu0 0.0
        %1200 = vmatprep.subr.mxu0 0.0
        %1201 = vmatpush2.msra.mxu0 0.0
        %1202 = vmatprep.subr.mxu0 0.0
        %1203 = vmatpush2.msra.mxu0 0.0
        %1204 = vmatprep.subr.mxu0 0.0
        %1205 = vmatpush2.msra.mxu0 0.0
        %1206 = vmatprep.subr.mxu0 0.0
        %1207 = vmatpush2.msra.mxu0 0.0
        %1208 = vmatprep.subr.mxu0 0.0
        %1209 = vmatpush2.msra.mxu0 0.0
        %1210 = vmatprep.subr.mxu0 0.0
        %1211 = vmatpush2.msra.mxu0 0.0
        %1212 = vmatprep.subr.mxu0 0.0
        %1213 = vmatpush2.msra.mxu0 0.0
        %1214 = vmatprep.subr.mxu0 0.0
        %1215 = vmatpush2.msra.mxu0 0.0
        %1216 = vmatprep.subr.mxu0 0.0
        %1217 = vmatpush2.msra.mxu0 0.0
        %1218 = vmatprep.subr.mxu0 0.0
        %1219 = vmatpush2.msra.mxu0 0.0
        %1220 = vmatprep.subr.mxu0 0.0
        %1221 = vmatpush2.msra.mxu0 0.0
        %1222 = vmatprep.subr.mxu0 0.0
        %1223 = vmatpush2.msra.mxu0 0.0
        %1224 = vmatprep.mubr.f32.mxu0 0.0
        %1225 = vmatmul.mubr.f32.gmra.mxu0 %v920
        %v1226 = vpop.f32.mrf.mxu0
        %v1227 = vadd.f32 %v914, %v1226
        %v1228 = vpop.f32.mrf.mxu0
        %v1229 = vadd.f32 %v916, %v1228
        %1230 = vdwg.mxu0
        %v1231 = vld [vmem:[#allocation10] sm:$0xff]
        %v1233 = vlaneseq
        %v1234 = vshrl.u32 %v1233, 7
        %v1235 = vsub.s32 0, %v1234
        %v1236 = vrot.slane %v1231, %v1235
        %v1237 = vlaneseq
        %v1238 = vshrl.u32 %v1237, 7
        %v1239 = vsub.s32 1, %v1238
        %v1240 = vrot.slane %v1231, %v1239
        %v1241 = vlaneseq
        %v1242 = vshrl.u32 %v1241, 7
        %v1243 = vsub.s32 2, %v1242
        %v1244 = vrot.slane %v1231, %v1243
        %v1245 = vlaneseq
        %v1246 = vshrl.u32 %v1245, 7
        %v1247 = vsub.s32 3, %v1246
        %v1248 = vrot.slane %v1231, %v1247
        %v1249 = vlaneseq
        %v1250 = vshrl.u32 %v1249, 7
        %v1251 = vsub.s32 4, %v1250
        %v1252 = vrot.slane %v1231, %v1251
        %v1253 = vlaneseq
        %v1254 = vshrl.u32 %v1253, 7
        %v1255 = vsub.s32 5, %v1254
        %v1256 = vrot.slane %v1231, %v1255
        %v1257 = vlaneseq
        %v1258 = vshrl.u32 %v1257, 7
        %v1259 = vsub.s32 6, %v1258
        %v1260 = vrot.slane %v1231, %v1259
        %v1261 = vlaneseq
        %v1262 = vshrl.u32 %v1261, 7
        %v1263 = vsub.s32 7, %v1262
        %v1264 = vrot.slane %v1231, %v1263
        %v1273 = vadd.f32 %v1014, %v1236
        %v1274 = vadd.f32 %v1016, %v1240
        %v1275 = vadd.f32 %v1085, %v1244
        %v1276 = vadd.f32 %v1087, %v1248
        %v1277 = vadd.f32 %v1156, %v1252
        %v1278 = vadd.f32 %v1158, %v1256
        %v1279 = vadd.f32 %v1227, %v1260
        %v1280 = vadd.f32 %v1229, %v1264
        %v1281 = vxor.u32 %v1273, 2147483648
        %v1282 = vxor.u32 %v1274, 2147483648
        %v1283 = vmul.f32 %v1281, 1.442695
        %v1284 = vpow.pop %v1283
        %v1285 = vmul.f32 %v1282, 1.442695
        %v1286 = vpow.pop %v1285
        %v1287 = vadd.f32 %v1284, 1.0
        %v1288 = vadd.f32 %v1286, 1.0
        %v1289 = vrcp.pop %v1287
        %v1290 = vmul.f32 1.0, %v1289
        %v1291 = vrcp.pop %v1288
        %v1292 = vmul.f32 1.0, %v1291
        %v1293 = vxor.u32 %v1275, 2147483648
        %v1294 = vxor.u32 %v1276, 2147483648
        %v1295 = vmul.f32 %v1293, 1.442695
        %v1296 = vpow.pop %v1295
        %v1297 = vmul.f32 %v1294, 1.442695
        %v1298 = vpow.pop %v1297
        %v1299 = vadd.f32 %v1296, 1.0
        %v1300 = vadd.f32 %v1298, 1.0
        %v1301 = vrcp.pop %v1299
        %v1302 = vmul.f32 1.0, %v1301
        %v1303 = vrcp.pop %v1300
        %v1304 = vmul.f32 1.0, %v1303
        %v1305 = vtanh.pop %v1277
        %v1306 = vtanh.pop %v1278
        %v1307 = vxor.u32 %v1279, 2147483648
        %v1308 = vxor.u32 %v1280, 2147483648
        %v1309 = vmul.f32 %v1307, 1.442695
        %v1310 = vpow.pop %v1309
        %v1311 = vmul.f32 %v1308, 1.442695
        %v1312 = vpow.pop %v1311
        %v1313 = vadd.f32 %v1310, 1.0
        %v1314 = vadd.f32 %v1312, 1.0
        %v1315 = vrcp.pop %v1313
        %v1316 = vmul.f32 1.0, %v1315
        %v1317 = vrcp.pop %v1314
        %v1318 = vmul.f32 1.0, %v1317
        %v1319 = vld [vmem:[#allocation3] sm:$0xf]
        %v1322 = vunpack.c.l.s4 1983009808
        %v1323 = vunpack.c.0.s8 %v1322
        %v1324 = vlaneseq
        %v1325 = vshrl.u32 %v1324, 7
        %v1326 = vsub.s32 %v1323, %v1325
        %v1327 = vrot.slane %v1319, %v1326
        %v1328 = vcombine.high %v1327, %v1327
        %v1331 = vmul.f32 %v1302, %v1327
        %v1332 = vmul.f32 %v1304, %v1328
        %v1333 = vmul.f32 %v1290, %v1305
        %v1334 = vmul.f32 %v1292, %v1306
        %v1335 = vadd.f32 %v1331, %v1333
        %v1336 = vadd.f32 %v1332, %v1334
        %v1337 = vtanh.pop %v1335
        %v1338 = vtanh.pop %v1336
        %v1339 = vmul.f32 %v1316, %v1337
        %v1340 = vmul.f32 %v1318, %v1338
        %v1343 = vcombine.low %v1335, %v1336
        %v1345 = vunpack.c.l.s4 1983009808
        %v1346 = vunpack.c.0.s8 %v1345
        %v1347 = vlaneseq
        %v1348 = vshrl.u32 %v1347, 7
        %v1349 = vsub.s32 %v1346, %v1348
        %v1350 = vrot.slane %v1343, %v1349
        %1352 = vst [vmem:[#allocation3] sm:$0xf] %v1350
        %v1355 = vcombine.low %v1339, %v1340
        %v1357 = vunpack.c.l.s4 1983009808
        %v1358 = vunpack.c.0.s8 %v1357
        %v1359 = vlaneseq
        %v1360 = vshrl.u32 %v1359, 7
        %v1361 = vsub.s32 %v1358, %v1360
        %v1362 = vrot.slane %v1355, %v1361
        %1364 = vst [vmem:[#allocation2] sm:$0xf] %v1362
        %1365 = vst [vmem:[%s254] sm:$0xf] %v1362
        %s1366 = sand.u32 %s120, 1
        %s1367 = scalar_lea.sflag [#allocation6], %s1366
        %s1368 = sand.u32 %s120, 1
        %s1369 = smul.addr %s1368, 4
        %s1370 = scalar_lea.vmem [#allocation12], %s1369
        // Predicated region
        $region57: #{tpu_custom_call.1} parent=35 // pred_check
          %p1371 = pneg %p130
        $region58: #{tpu_custom_call.1} parent=35 // pred_check_branch
          %1373 = sbr.rel (%p1371) target = $region60
        $region59: #{tpu_custom_call.1} parent=35 // pred_region
          %s1375 = ssub.s32 64, 64
          %1376 = vsyncadd %s1367, %s1375
          %s1377 = smul.addr %s23, 2
          %s1378 = smul.addr %s1377, 32
          %s1379 = scalar_lea.hbm %s4, %s1378
          %s1381 = sshll.u32 %s1370, 4
          %s1382 = int_to_ptr.vmem [resolvable:$true] %s1381
          %1384 = dma.vmem_to_hbm [thread:$0]  %s1382, 64, %s1379, %s1367
        $region60: #{tpu_custom_call.1} parent=35 // pred_fallthru
          _
      $region36: #{tpu_custom_call.1} parent=5 // pred_fallthru
        _
      %p1385 = scmp.le.s32.totalorder 2, %s18
      // Predicated region
      $region61: #{tpu_custom_call.1} parent=5 // pred_check
        %p1386 = pneg %p1385
      $region62: #{tpu_custom_call.1} parent=5 // pred_check_branch
        %1388 = sbr.rel (%p1386) target = $region64
      $region63: #{tpu_custom_call.1} parent=5 // pred_region
        %s1389 = ssub.s32 %s18, 2
        // Predicated region
        $region65: #{tpu_custom_call.1} parent=63 // pred_check
          %p1390 = pneg %p136
        $region66: #{tpu_custom_call.1} parent=63 // pred_check_branch
          %1392 = sbr.rel (%p1390) target = $region68
        $region67: #{tpu_custom_call.1} parent=63 // pred_region
          %s1393 = sand.u32 %s121, 1
          %s1394 = scalar_lea.sflag [#allocation6], %s1393
          %s1395 = sand.u32 %s121, 1
          %s1396 = smul.addr %s1395, 4
          %s1397 = scalar_lea.vmem [#allocation12], %s1396
          %1398 = dma.done %s1394, 64
        $region68: #{tpu_custom_call.1} parent=63 // pred_fallthru
          _
      $region64: #{tpu_custom_call.1} parent=5 // pred_fallthru
        _
    $region6: #{tpu_custom_call.1} parent=1 // loop_footer
      %s22 = sadd.s32 1, %s18
    $region7: #{tpu_custom_call.1} parent=1 // loop_footer_branch
      %17 = sbr.rel target = $region3
    $region8: #{tpu_custom_call.1} parent=1 // loop_exit
      _
    %1399 = vsyncpa [#allocation5], 1
    %s1400 = scalar_lea.sflag [#allocation5], 1
    %1401 = vsyncpa %s1400, 1
    %1402 = vsyncpa [#allocation8], 1
    %1403 = vsyncpa [#allocation11], 1
    %1404 = vsyncpa [#allocation6], 1
    %s1405 = scalar_lea.sflag [#allocation6], 1
    %1406 = vsyncpa %s1405, 1

</llo_original>
